<compile_context>
chip_gen: v6e
topology: v6e:2x2x1
jax: 0.10.0
libtpu: 0.0.40
codegen_flags: <defaults>
</compile_context>

<pallas_src>
import functools

import jax
import jax.numpy as jnp
from jax.experimental import pallas as pl
from jax.experimental.pallas import tpu as pltpu

BN_EPS = 1e-5
LANE = 128
VMEM_SPEC = pl.BlockSpec(memory_space=pltpu.MemorySpace.VMEM)


def _pad128(n):
    return ((n + LANE - 1) // LANE) * LANE


def _pad_last(a, target):
    return jnp.pad(a, [(0, 0)] * (a.ndim - 1) + [(0, target - a.shape[-1])])


def _embed(a, shape, offsets, fill=0.0):
    out = jnp.full(shape, fill, jnp.float32)
    idx = tuple(slice(o, o + s) for o, s in zip(offsets, a.shape))
    return out.at[idx].set(a.astype(jnp.float32))


# ----------------------------------------------------------------------------------
# Single fused kernel: all EB layers (+ BN on z) + fc_metafeatures head.
#   per layer i:
#     H       = x_in @ [Wx | Wz] (+ lab @ [Wx_lab | Wz_lab] at layer 0)   bf16 MXU
#     x_next  = relu(H[:, :DOPAD] + bx)                                    [B*P, DOPAD]
#     z_new   = avg @ H[:, DOPAD:] + bz     (avg rows = 1/P -> per-batch mean)
#     z       = (z_prev "concat" z_new via disjoint lanes)  -> BN -> stored
#   head: z -> (Linear -> [BN] -> ReLU -> Dropout)* -> Linear, all in VMEM.
# TODO(synk): EB / EB_variable source was not provided; the point/moment math above
# is a deterministic stand-in with the correct interface shapes.
# ----------------------------------------------------------------------------------
def _extractor_kernel(*refs, n_eb, n_fc, use_bn, skip, dopads):
    n_out = 1 + n_eb + n_fc
    in_refs = refs[:-n_out]
    out_refs = refs[-n_out:]
    x_out_ref = out_refs[0]
    z_out_refs = out_refs[1:1 + n_eb]
    fc_out_refs = out_refs[1 + n_eb:]

    it = iter(in_refs)
    h_in = next(it)[...]          # [B*P, FPAD0] bf16 (point stream, folded B*P rows)
    lab = next(it)[...]           # [B*P, LPAD]  bf16
    avg = next(it)[...]           # [B, B*P]     bf16, rows of 1/P -> per-batch mean

    z = None
    x_pt = None
    for i in range(n_eb):
        w = next(it)[...]                         # [IN_PAD, DOPAD_i + ZPAD] bf16
        wl = next(it)[...] if i == 0 else None    # [LPAD,   DOPAD_0 + ZPAD] bf16
        bx = next(it)[...]                        # [1, DOPAD_i] f32
        bz = next(it)[...]                        # [1, ZPAD]    f32

        # One wide matmul feeds both streams (point cols | moment cols).
        h = jnp.dot(h_in, w, preferred_element_type=jnp.float32)
        if i == 0:
            # concat([x, lab]) along features == sum of two matmuls.
            h = h + jnp.dot(lab, wl, preferred_element_type=jnp.float32)

        dop = dopads[i]
        x_pt = jnp.maximum(h[:, :dop] + bx, 0.0)            # point stream [B*P, DOPAD]
        # Dropout(0.01) on x is identity in eval mode.

        # Moment stream: per-batch mean over points via a tiny averaging matmul.
        z_new = jnp.dot(avg, h[:, dop:].astype(jnp.bfloat16),
                        preferred_element_type=jnp.float32) + bz   # [B, ZPAD]
        if skip and i > 0:
            # skip connection: previous z occupies disjoint lanes of the padded
            # buffer and this layer's Wz/bz columns are shifted past it -> concat==add
            z_new = z_new + z
        if use_bn:
            g, be, rm, rv = (next(it)[...], next(it)[...],
                             next(it)[...], next(it)[...])
            z_new = (z_new - rm) * jax.lax.rsqrt(rv + BN_EPS) * g + be
        # Dropout(0.01) on z is identity in eval mode.
        z = z_new
        z_out_refs[i][...] = z
        h_in = x_pt.astype(jnp.bfloat16)          # next layer's MXU input (bf16)

    x_out_ref[...] = x_pt

    # fc_metafeatures head: z stays in VMEM, layers unrolled statically.
    zf = z
    for i in range(n_fc):
        last = i == n_fc - 1
        w = next(it)[...]
        b = next(it)[...]
        zf = jnp.dot(zf.astype(jnp.bfloat16), w,
                     preferred_element_type=jnp.float32) + b
        if not last:
            if use_bn:
                g, be, rm, rv = (next(it)[...], next(it)[...],
                                 next(it)[...], next(it)[...])
                zf = (zf - rm) * jax.lax.rsqrt(rv + BN_EPS) * g + be
            zf = jnp.maximum(zf, 0.0)   # ReLU applies whether or not BN is used.
            # Dropout(dropout_fc[i]) is identity in eval mode.
        fc_out_refs[i][...] = zf


# ----------------------------------------------------------------------------------
# Parameter construction (deterministic, in-script) + padded / packed layouts.
# ----------------------------------------------------------------------------------
def _linear_raw(key, d_in, d_out):
    kw, kb = jax.random.split(key)
    w = 0.1 * jax.random.normal(kw, (d_in, d_out), jnp.float32)
    b = 0.1 * jax.random.normal(kb, (d_out,), jnp.float32)
    return w, b


def _bn_raw(key, d):
    kg, kb, km, kv = jax.random.split(key, 4)
    gamma = 1.0 + 0.1 * jax.random.normal(kg, (d,), jnp.float32)
    beta = 0.1 * jax.random.normal(kb, (d,), jnp.float32)
    rmean = 0.1 * jax.random.normal(km, (d,), jnp.float32)
    rvar = 1.0 + 0.1 * jax.random.uniform(kv, (d,), jnp.float32)
    return gamma, beta, rmean, rvar


class ExtractorPallas:
    def __init__(self, key, d_Mfeat, d_Mlab, npoints, N, nmoments, d_out,
                 skip_connection, use_batchnorm, fc_metafeatures, tensorizations,
                 dropout_fc):
        # N / tensorizations are consumed only inside EB / EB_variable (stand-in
        # ignores them); dropout_fc rates are identity in eval mode.
        self.N = N
        self.tensorizations = tensorizations
        self.dropout_fc = dropout_fc
        self.d_Mfeat = list(d_Mfeat)
        self.d_Mlab = list(d_Mlab)
        self.npoints = npoints
        self.nmoments = list(nmoments)
        self.d_out = list(d_out)
        self.skip_connection = skip_connection
        self.use_batchnorm = use_batchnorm
        self.fc_metafeatures = list(fc_metafeatures)
        self.n_eb = len(nmoments)

        # Real ("logical") width of z after each EB layer, matching the forward.
        self.z_width = []
        for i in range(self.n_eb):
            if i == 0 or not skip_connection:
                self.z_width.append(nmoments[i])
            else:
                self.z_width.append(self.z_width[-1] + nmoments[i])
        self.ZPAD = _pad128(max(self.z_width))
        self.FPAD0 = _pad128(d_Mfeat[0])
        self.LPAD = _pad128(d_Mlab[0])
        self.DOPAD = [_pad128(d) for d in d_out]

        keys = iter(jax.random.split(key, 3 * self.n_eb + 2 * len(fc_metafeatures)))

        # EB stand-in parameters + BN-on-z parameters; Wx|Wz packed column-wise into
        # one wide (256-lane) RHS per layer, weights stored in bf16 for the MXU.
        self.eb_params, self.ref_eb = [], []
        for i in range(self.n_eb):
            d_in = (d_Mfeat[i] + d_Mlab[i]) if i == 0 else d_out[i - 1]
            wx, bx = _linear_raw(next(keys), d_in, d_out[i])
            wz, bz = _linear_raw(next(keys), d_in, nmoments[i])
            bn = _bn_raw(next(keys), self.z_width[i]) if use_batchnorm else None
            self.ref_eb.append((wx, bx, wz, bz, bn))

            off = 0 if (i == 0 or not skip_connection) else self.z_width[i - 1]
            dop = self.DOPAD[i]
            wide = dop + self.ZPAD
            p = {}
            if i == 0:
                fin = d_Mfeat[0]
                wpk = jnp.zeros((self.FPAD0, wide), jnp.float32)
                wpk = wpk.at[:fin, :d_out[0]].set(wx[:fin])
                wpk = wpk.at[:fin, dop + off: dop + off + nmoments[0]].set(wz[:fin])
                wpk_l = jnp.zeros((self.LPAD, wide), jnp.float32)
                wpk_l = wpk_l.at[:d_Mlab[0], :d_out[0]].set(wx[fin:])
                wpk_l = wpk_l.at[:d_Mlab[0],
                                 dop + off: dop + off + nmoments[0]].set(wz[fin:])
                p["w"] = wpk.astype(jnp.bfloat16)
                p["wl"] = wpk_l.astype(jnp.bfloat16)
            else:
                in_pad = self.DOPAD[i - 1]
                wpk = jnp.zeros((in_pad, wide), jnp.float32)
                wpk = wpk.at[:d_out[i - 1], :d_out[i]].set(wx)
                wpk = wpk.at[:d_out[i - 1],
                             dop + off: dop + off + nmoments[i]].set(wz)
                p["w"] = wpk.astype(jnp.bfloat16)
            p["bx"] = _embed(bx[None, :], (1, dop), (0, 0))
            p["bz"] = _embed(bz[None, :], (1, self.ZPAD), (0, off))
            if use_batchnorm:
                g, be, rm, rv = bn
                p["bn"] = (_embed(g[None, :], (1, self.ZPAD), (0, 0)),
                           _embed(be[None, :], (1, self.ZPAD), (0, 0)),
                           _embed(rm[None, :], (1, self.ZPAD), (0, 0)),
                           _embed(rv[None, :], (1, self.ZPAD), (0, 0), fill=1.0))
            self.eb_params.append(p)

        # fc_metafeatures head.
        # TODO(synk): torch sizes list_fc[0] from nmoments[-1], which is only
        # consistent with the forward when skip_connection=False; under skip we size
        # it from the actual concatenated z width so the graph is runnable.
        fc_in0 = nmoments[-1] if not skip_connection else self.z_width[-1]
        self.fc_params, self.ref_fc = [], []
        n_fc = len(fc_metafeatures)
        for i, dim in enumerate(fc_metafeatures):
            d_in = fc_in0 if i == 0 else fc_metafeatures[i - 1]
            w, b = _linear_raw(next(keys), d_in, dim)
            in_pad = self.ZPAD if i == 0 else _pad128(fc_metafeatures[i - 1])
            d_pad = _pad128(dim)
            q = {"w": _embed(w, (in_pad, d_pad), (0, 0)).astype(jnp.bfloat16),
                 "b": _embed(b[None, :], (1, d_pad), (0, 0))}
            bn = None
            if i != n_fc - 1:
                bn = _bn_raw(next(keys), dim)
                if use_batchnorm:
                    g, be, rm, rv = bn
                    q["bn"] = (_embed(g[None, :], (1, d_pad), (0, 0)),
                               _embed(be[None, :], (1, d_pad), (0, 0)),
                               _embed(rm[None, :], (1, d_pad), (0, 0)),
                               _embed(rv[None, :], (1, d_pad), (0, 0), fill=1.0))
            self.fc_params.append(q)
            self.ref_fc.append((w, b, bn))

    def __call__(self, x, lab, info):
        # TODO(synk): `info` (and torch.zeros(batch, 1)) are only consumed inside
        # EB_variable whose source is unavailable; the stand-in ignores them.
        del info
        B, P, _ = x.shape
        # Lane-pad + fold B*P into the matmul M dimension, once, in bf16.
        x_flat = (_pad_last(x, self.FPAD0)
                  .reshape(B * P, self.FPAD0).astype(jnp.bfloat16))
        lab_flat = (_pad_last(lab, self.LPAD)
                    .reshape(B * P, self.LPAD).astype(jnp.bfloat16))
        # Averaging matrix: row b has 1/P over that batch element's P rows.
        avg = (jnp.repeat(jnp.eye(B, dtype=jnp.float32), P, axis=1)
               * (1.0 / float(P))).astype(jnp.bfloat16)

        inputs = [x_flat, lab_flat, avg]
        for i, p in enumerate(self.eb_params):
            inputs.append(p["w"])
            if i == 0:
                inputs.append(p["wl"])
            inputs += [p["bx"], p["bz"]]
            if self.use_batchnorm:
                inputs += list(p["bn"])
        n_fc = len(self.fc_params)
        for i, q in enumerate(self.fc_params):
            inputs += [q["w"], q["b"]]
            if i != n_fc - 1 and self.use_batchnorm:
                inputs += list(q["bn"])

        out_shape = ([jax.ShapeDtypeStruct((B * P, self.DOPAD[-1]), jnp.float32)]
                     + [jax.ShapeDtypeStruct((B, self.ZPAD), jnp.float32)
                        for _ in range(self.n_eb)]
                     + [jax.ShapeDtypeStruct((B, _pad128(d)), jnp.float32)
                        for d in self.fc_metafeatures])

        kernel = functools.partial(
            _extractor_kernel, n_eb=self.n_eb, n_fc=n_fc,
            use_bn=self.use_batchnorm, skip=self.skip_connection,
            dopads=tuple(self.DOPAD))

        outs = pl.pallas_call(
            kernel,
            out_shape=tuple(out_shape),
            in_specs=[VMEM_SPEC] * len(inputs),
            out_specs=tuple(VMEM_SPEC for _ in out_shape),
            compiler_params=pltpu.CompilerParams(
                vmem_limit_bytes=32 * 1024 * 1024),
        )(*inputs)

        x_out_flat = outs[0]
        z_pads = outs[1:1 + self.n_eb]
        fc_outs = outs[1 + self.n_eb:]

        # Slice the padded lanes off only here, at the very end.
        x_final = x_out_flat.reshape(B, P, self.DOPAD[-1])[:, :, : self.d_out[-1]]
        z_final = fc_outs[-1][:, : self.fc_metafeatures[-1]]
        list_z = [z_pads[i][:, : self.z_width[i]] for i in range(self.n_eb)]
        list_z += [fc_outs[i][:, : self.fc_metafeatures[i]]
                   for i in range(len(self.fc_metafeatures))]
        return z_final, x_final, list_z


# Pure-JAX reference of the same stand-in math (unpadded, f32), for correctness.
def _reference_forward(model, x, lab):
    hp = jax.lax.Precision.HIGHEST
    xs, z = x, None
    for i, (wx, bx, wz, bz, bn) in enumerate(model.ref_eb):
        x_in = jnp.concatenate([xs, lab], axis=-1) if i == 0 else xs
        xs = jnp.maximum(jnp.einsum("bpf,fo->bpo", x_in, wx, precision=hp) + bx, 0.0)
        z_out = jnp.mean(jnp.einsum("bpf,fm->bpm", x_in, wz, precision=hp),
                         axis=1) + bz
        z = (jnp.concatenate([z, z_out], axis=1)
             if (model.skip_connection and i > 0) else z_out)
        if model.use_batchnorm:
            g, be, rm, rv = bn
            z = (z - rm) * jax.lax.rsqrt(rv + BN_EPS) * g + be
    n_fc = len(model.ref_fc)
    for i, (w, b, bn) in enumerate(model.ref_fc):
        z = jnp.dot(z, w, precision=hp) + b
        if i != n_fc - 1:
            if model.use_batchnorm:
                g, be, rm, rv = bn
                z = (z - rm) * jax.lax.rsqrt(rv + BN_EPS) * g + be
            z = jnp.maximum(z, 0.0)
    return z, xs


if __name__ == "__main__":
    batch = 2
    N = 4
    npoints = 8
    d_Mfeat = [3, 3]
    d_Mlab = [2, 2]
    nmoments = [5, 6]
    d_out = [4, 4]
    skip_connection = False   # matches the consistent BN/FC sizing in the torch init
    use_batchnorm = True
    fc_metafeatures = [16, 8]
    tensorizations = [1, 1]
    dropout_fc = [0.1]

    key = jax.random.PRNGKey(0)
    k_model, k_x, k_lab, k_info = jax.random.split(key, 4)

    model = ExtractorPallas(k_model, d_Mfeat, d_Mlab, npoints, N, nmoments, d_out,
                            skip_connection, use_batchnorm, fc_metafeatures,
                            tensorizations, dropout_fc)

    x = jax.random.normal(k_x, (batch, npoints, d_Mfeat[0]), jnp.float32)
    lab = jax.random.normal(k_lab, (batch, npoints, d_Mlab[0]), jnp.float32)
    info = jax.random.normal(k_info, (batch, N), jnp.float32)

    z, x_out, list_z = model(x, lab, info)
    jax.block_until_ready(z)
    jax.block_until_ready(x_out)
    for t in list_z:
        jax.block_until_ready(t)

    assert z.shape == (batch, fc_metafeatures[-1])
    assert x_out.shape == (batch, npoints, d_out[-1])
    assert len(list_z) == len(nmoments) + len(fc_metafeatures)

    # Cross-check the fused / bf16-MXU Pallas path against the f32 JAX reference.
    # Tolerance covers the bf16 matmul inputs (f32 accumulation is kept).
    z_ref, x_ref = _reference_forward(model, x, lab)
    assert jnp.allclose(z, z_ref, atol=2e-2, rtol=2e-2), \
        float(jnp.max(jnp.abs(z - z_ref)))
    assert jnp.allclose(x_out, x_ref, atol=2e-2, rtol=2e-2), \
        float(jnp.max(jnp.abs(x_out - x_ref)))

    print("KERNEL_OK")
</pallas_src>

<mosaic_0001>
module attributes {stable_mosaic.version = 11 : i64} {
  func.func @_extractor_kernel(%arg0: memref<16x128xbf16, #tpu.memory_space<vmem>>, %arg1: memref<16x128xbf16, #tpu.memory_space<vmem>>, %arg2: memref<2x16xbf16, #tpu.memory_space<vmem>>, %arg3: memref<128x256xbf16, #tpu.memory_space<vmem>>, %arg4: memref<128x256xbf16, #tpu.memory_space<vmem>>, %arg5: memref<1x128xf32, #tpu.memory_space<vmem>>, %arg6: memref<1x128xf32, #tpu.memory_space<vmem>>, %arg7: memref<1x128xf32, #tpu.memory_space<vmem>>, %arg8: memref<1x128xf32, #tpu.memory_space<vmem>>, %arg9: memref<1x128xf32, #tpu.memory_space<vmem>>, %arg10: memref<1x128xf32, #tpu.memory_space<vmem>>, %arg11: memref<128x256xbf16, #tpu.memory_space<vmem>>, %arg12: memref<1x128xf32, #tpu.memory_space<vmem>>, %arg13: memref<1x128xf32, #tpu.memory_space<vmem>>, %arg14: memref<1x128xf32, #tpu.memory_space<vmem>>, %arg15: memref<1x128xf32, #tpu.memory_space<vmem>>, %arg16: memref<1x128xf32, #tpu.memory_space<vmem>>, %arg17: memref<1x128xf32, #tpu.memory_space<vmem>>, %arg18: memref<128x128xbf16, #tpu.memory_space<vmem>>, %arg19: memref<1x128xf32, #tpu.memory_space<vmem>>, %arg20: memref<1x128xf32, #tpu.memory_space<vmem>>, %arg21: memref<1x128xf32, #tpu.memory_space<vmem>>, %arg22: memref<1x128xf32, #tpu.memory_space<vmem>>, %arg23: memref<1x128xf32, #tpu.memory_space<vmem>>, %arg24: memref<128x128xbf16, #tpu.memory_space<vmem>>, %arg25: memref<1x128xf32, #tpu.memory_space<vmem>>, %arg26: memref<16x128xf32, #tpu.memory_space<vmem>>, %arg27: memref<2x128xf32, #tpu.memory_space<vmem>>, %arg28: memref<2x128xf32, #tpu.memory_space<vmem>>, %arg29: memref<2x128xf32, #tpu.memory_space<vmem>>, %arg30: memref<2x128xf32, #tpu.memory_space<vmem>>) attributes {dimension_semantics = [], scalar_prefetch = 0 : i64, scratch_operands = 0 : i64, tpu.core_type = #tpu.core_type<tc>} {
    %c0 = arith.constant 0 : index
    %c0_0 = arith.constant 0 : index
    %0 = vector.load %arg0[%c0, %c0_0] : memref<16x128xbf16, #tpu.memory_space<vmem>>, vector<16x128xbf16>
    %c0_1 = arith.constant 0 : index
    %c0_2 = arith.constant 0 : index
    %1 = vector.load %arg1[%c0_1, %c0_2] : memref<16x128xbf16, #tpu.memory_space<vmem>>, vector<16x128xbf16>
    %c0_3 = arith.constant 0 : index
    %c0_4 = arith.constant 0 : index
    %2 = vector.load %arg2[%c0_3, %c0_4] : memref<2x16xbf16, #tpu.memory_space<vmem>>, vector<2x16xbf16>
    %c0_5 = arith.constant 0 : index
    %c0_6 = arith.constant 0 : index
    %3 = vector.load %arg3[%c0_5, %c0_6] : memref<128x256xbf16, #tpu.memory_space<vmem>>, vector<128x256xbf16>
    %c0_7 = arith.constant 0 : index
    %c0_8 = arith.constant 0 : index
    %4 = vector.load %arg4[%c0_7, %c0_8] : memref<128x256xbf16, #tpu.memory_space<vmem>>, vector<128x256xbf16>
    %c0_9 = arith.constant 0 : index
    %c0_10 = arith.constant 0 : index
    %5 = vector.load %arg5[%c0_9, %c0_10] : memref<1x128xf32, #tpu.memory_space<vmem>>, vector<1x128xf32>
    %c0_11 = arith.constant 0 : index
    %c0_12 = arith.constant 0 : index
    %6 = vector.load %arg6[%c0_11, %c0_12] : memref<1x128xf32, #tpu.memory_space<vmem>>, vector<1x128xf32>
    %cst = arith.constant dense<0.000000e+00> : vector<16x256xf32>
    %7 = tpu.matmul %0, %3, %cst {dimension_numbers = #tpu.dot_dimension_numbers<[1], [0], [0], [1], [0, 0, 1, 1], [], []>} : vector<16x128xbf16>, vector<128x256xbf16>, vector<16x256xf32> -> vector<16x256xf32>
    %cst_13 = arith.constant dense<0.000000e+00> : vector<16x256xf32>
    %8 = tpu.matmul %1, %4, %cst_13 {dimension_numbers = #tpu.dot_dimension_numbers<[1], [0], [0], [1], [0, 0, 1, 1], [], []>} : vector<16x128xbf16>, vector<128x256xbf16>, vector<16x256xf32> -> vector<16x256xf32>
    %9 = arith.addf %7, %8 : vector<16x256xf32>
    %10 = vector.extract_strided_slice %9 {offsets = [0, 0], sizes = [16, 128], strides = [1, 1]} : vector<16x256xf32> to vector<16x128xf32>
    %11 = vector.broadcast %5 : vector<1x128xf32> to vector<16x128xf32>
    %12 = arith.addf %10, %11 : vector<16x128xf32>
    %cst_14 = arith.constant 0.000000e+00 : f32
    %13 = vector.broadcast %cst_14 : f32 to vector<16x128xf32>
    %14 = arith.maximumf %12, %13 : vector<16x128xf32>
    %15 = vector.extract_strided_slice %9 {offsets = [0, 128], sizes = [16, 128], strides = [1, 1]} : vector<16x256xf32> to vector<16x128xf32>
    %16 = arith.truncf %15 : vector<16x128xf32> to vector<16x128xbf16>
    %cst_15 = arith.constant dense<0.000000e+00> : vector<2x128xf32>
    %17 = tpu.matmul %2, %16, %cst_15 {dimension_numbers = #tpu.dot_dimension_numbers<[1], [0], [0], [1], [0, 0, 1, 1], [], []>} : vector<2x16xbf16>, vector<16x128xbf16>, vector<2x128xf32> -> vector<2x128xf32>
    %18 = vector.broadcast %6 : vector<1x128xf32> to vector<2x128xf32>
    %19 = arith.addf %17, %18 : vector<2x128xf32>
    %c0_16 = arith.constant 0 : index
    %c0_17 = arith.constant 0 : index
    %20 = vector.load %arg7[%c0_16, %c0_17] : memref<1x128xf32, #tpu.memory_space<vmem>>, vector<1x128xf32>
    %c0_18 = arith.constant 0 : index
    %c0_19 = arith.constant 0 : index
    %21 = vector.load %arg8[%c0_18, %c0_19] : memref<1x128xf32, #tpu.memory_space<vmem>>, vector<1x128xf32>
    %c0_20 = arith.constant 0 : index
    %c0_21 = arith.constant 0 : index
    %22 = vector.load %arg9[%c0_20, %c0_21] : memref<1x128xf32, #tpu.memory_space<vmem>>, vector<1x128xf32>
    %c0_22 = arith.constant 0 : index
    %c0_23 = arith.constant 0 : index
    %23 = vector.load %arg10[%c0_22, %c0_23] : memref<1x128xf32, #tpu.memory_space<vmem>>, vector<1x128xf32>
    %24 = vector.broadcast %22 : vector<1x128xf32> to vector<2x128xf32>
    %25 = arith.subf %19, %24 : vector<2x128xf32>
    %cst_24 = arith.constant 9.99999974E-6 : f32
    %26 = vector.broadcast %cst_24 : f32 to vector<1x128xf32>
    %27 = arith.addf %23, %26 : vector<1x128xf32>
    %28 = math.rsqrt %27 : vector<1x128xf32>
    %29 = vector.broadcast %28 : vector<1x128xf32> to vector<2x128xf32>
    %30 = arith.mulf %25, %29 : vector<2x128xf32>
    %31 = vector.broadcast %20 : vector<1x128xf32> to vector<2x128xf32>
    %32 = arith.mulf %30, %31 : vector<2x128xf32>
    %33 = vector.broadcast %21 : vector<1x128xf32> to vector<2x128xf32>
    %34 = arith.addf %32, %33 : vector<2x128xf32>
    %c0_25 = arith.constant 0 : index
    %c0_26 = arith.constant 0 : index
    %35 = vector.load %arg27[%c0_25, %c0_26] : memref<2x128xf32, #tpu.memory_space<vmem>>, vector<2x128xf32>
    tpu.vector_store %arg27[%c0_25, %c0_26], %34 {strides = array<i32>} : memref<2x128xf32, #tpu.memory_space<vmem>>, vector<2x128xf32>,
    %36 = arith.truncf %14 : vector<16x128xf32> to vector<16x128xbf16>
    %c0_27 = arith.constant 0 : index
    %c0_28 = arith.constant 0 : index
    %37 = vector.load %arg11[%c0_27, %c0_28] : memref<128x256xbf16, #tpu.memory_space<vmem>>, vector<128x256xbf16>
    %c0_29 = arith.constant 0 : index
    %c0_30 = arith.constant 0 : index
    %38 = vector.load %arg12[%c0_29, %c0_30] : memref<1x128xf32, #tpu.memory_space<vmem>>, vector<1x128xf32>
    %c0_31 = arith.constant 0 : index
    %c0_32 = arith.constant 0 : index
    %39 = vector.load %arg13[%c0_31, %c0_32] : memref<1x128xf32, #tpu.memory_space<vmem>>, vector<1x128xf32>
    %cst_33 = arith.constant dense<0.000000e+00> : vector<16x256xf32>
    %40 = tpu.matmul %36, %37, %cst_33 {dimension_numbers = #tpu.dot_dimension_numbers<[1], [0], [0], [1], [0, 0, 1, 1], [], []>} : vector<16x128xbf16>, vector<128x256xbf16>, vector<16x256xf32> -> vector<16x256xf32>
    %41 = vector.extract_strided_slice %40 {offsets = [0, 0], sizes = [16, 128], strides = [1, 1]} : vector<16x256xf32> to vector<16x128xf32>
    %42 = vector.broadcast %38 : vector<1x128xf32> to vector<16x128xf32>
    %43 = arith.addf %41, %42 : vector<16x128xf32>
    %cst_34 = arith.constant 0.000000e+00 : f32
    %44 = vector.broadcast %cst_34 : f32 to vector<16x128xf32>
    %45 = arith.maximumf %43, %44 : vector<16x128xf32>
    %46 = vector.extract_strided_slice %40 {offsets = [0, 128], sizes = [16, 128], strides = [1, 1]} : vector<16x256xf32> to vector<16x128xf32>
    %47 = arith.truncf %46 : vector<16x128xf32> to vector<16x128xbf16>
    %cst_35 = arith.constant dense<0.000000e+00> : vector<2x128xf32>
    %48 = tpu.matmul %2, %47, %cst_35 {dimension_numbers = #tpu.dot_dimension_numbers<[1], [0], [0], [1], [0, 0, 1, 1], [], []>} : vector<2x16xbf16>, vector<16x128xbf16>, vector<2x128xf32> -> vector<2x128xf32>
    %49 = vector.broadcast %39 : vector<1x128xf32> to vector<2x128xf32>
    %50 = arith.addf %48, %49 : vector<2x128xf32>
    %c0_36 = arith.constant 0 : index
    %c0_37 = arith.constant 0 : index
    %51 = vector.load %arg14[%c0_36, %c0_37] : memref<1x128xf32, #tpu.memory_space<vmem>>, vector<1x128xf32>
    %c0_38 = arith.constant 0 : index
    %c0_39 = arith.constant 0 : index
    %52 = vector.load %arg15[%c0_38, %c0_39] : memref<1x128xf32, #tpu.memory_space<vmem>>, vector<1x128xf32>
    %c0_40 = arith.constant 0 : index
    %c0_41 = arith.constant 0 : index
    %53 = vector.load %arg16[%c0_40, %c0_41] : memref<1x128xf32, #tpu.memory_space<vmem>>, vector<1x128xf32>
    %c0_42 = arith.constant 0 : index
    %c0_43 = arith.constant 0 : index
    %54 = vector.load %arg17[%c0_42, %c0_43] : memref<1x128xf32, #tpu.memory_space<vmem>>, vector<1x128xf32>
    %55 = vector.broadcast %53 : vector<1x128xf32> to vector<2x128xf32>
    %56 = arith.subf %50, %55 : vector<2x128xf32>
    %cst_44 = arith.constant 9.99999974E-6 : f32
    %57 = vector.broadcast %cst_44 : f32 to vector<1x128xf32>
    %58 = arith.addf %54, %57 : vector<1x128xf32>
    %59 = math.rsqrt %58 : vector<1x128xf32>
    %60 = vector.broadcast %59 : vector<1x128xf32> to vector<2x128xf32>
    %61 = arith.mulf %56, %60 : vector<2x128xf32>
    %62 = vector.broadcast %51 : vector<1x128xf32> to vector<2x128xf32>
    %63 = arith.mulf %61, %62 : vector<2x128xf32>
    %64 = vector.broadcast %52 : vector<1x128xf32> to vector<2x128xf32>
    %65 = arith.addf %63, %64 : vector<2x128xf32>
    %c0_45 = arith.constant 0 : index
    %c0_46 = arith.constant 0 : index
    %66 = vector.load %arg28[%c0_45, %c0_46] : memref<2x128xf32, #tpu.memory_space<vmem>>, vector<2x128xf32>
    tpu.vector_store %arg28[%c0_45, %c0_46], %65 {strides = array<i32>} : memref<2x128xf32, #tpu.memory_space<vmem>>, vector<2x128xf32>,
    %c0_47 = arith.constant 0 : index
    %c0_48 = arith.constant 0 : index
    %67 = vector.load %arg26[%c0_47, %c0_48] : memref<16x128xf32, #tpu.memory_space<vmem>>, vector<16x128xf32>
    tpu.vector_store %arg26[%c0_47, %c0_48], %45 {strides = array<i32>} : memref<16x128xf32, #tpu.memory_space<vmem>>, vector<16x128xf32>,
    %c0_49 = arith.constant 0 : index
    %c0_50 = arith.constant 0 : index
    %68 = vector.load %arg18[%c0_49, %c0_50] : memref<128x128xbf16, #tpu.memory_space<vmem>>, vector<128x128xbf16>
    %c0_51 = arith.constant 0 : index
    %c0_52 = arith.constant 0 : index
    %69 = vector.load %arg19[%c0_51, %c0_52] : memref<1x128xf32, #tpu.memory_space<vmem>>, vector<1x128xf32>
    %70 = arith.truncf %65 : vector<2x128xf32> to vector<2x128xbf16>
    %cst_53 = arith.constant dense<0.000000e+00> : vector<2x128xf32>
    %71 = tpu.matmul %70, %68, %cst_53 {dimension_numbers = #tpu.dot_dimension_numbers<[1], [0], [0], [1], [0, 0, 1, 1], [], []>} : vector<2x128xbf16>, vector<128x128xbf16>, vector<2x128xf32> -> vector<2x128xf32>
    %72 = vector.broadcast %69 : vector<1x128xf32> to vector<2x128xf32>
    %73 = arith.addf %71, %72 : vector<2x128xf32>
    %c0_54 = arith.constant 0 : index
    %c0_55 = arith.constant 0 : index
    %74 = vector.load %arg20[%c0_54, %c0_55] : memref<1x128xf32, #tpu.memory_space<vmem>>, vector<1x128xf32>
    %c0_56 = arith.constant 0 : index
    %c0_57 = arith.constant 0 : index
    %75 = vector.load %arg21[%c0_56, %c0_57] : memref<1x128xf32, #tpu.memory_space<vmem>>, vector<1x128xf32>
    %c0_58 = arith.constant 0 : index
    %c0_59 = arith.constant 0 : index
    %76 = vector.load %arg22[%c0_58, %c0_59] : memref<1x128xf32, #tpu.memory_space<vmem>>, vector<1x128xf32>
    %c0_60 = arith.constant 0 : index
    %c0_61 = arith.constant 0 : index
    %77 = vector.load %arg23[%c0_60, %c0_61] : memref<1x128xf32, #tpu.memory_space<vmem>>, vector<1x128xf32>
    %78 = vector.broadcast %76 : vector<1x128xf32> to vector<2x128xf32>
    %79 = arith.subf %73, %78 : vector<2x128xf32>
    %cst_62 = arith.constant 9.99999974E-6 : f32
    %80 = vector.broadcast %cst_62 : f32 to vector<1x128xf32>
    %81 = arith.addf %77, %80 : vector<1x128xf32>
    %82 = math.rsqrt %81 : vector<1x128xf32>
    %83 = vector.broadcast %82 : vector<1x128xf32> to vector<2x128xf32>
    %84 = arith.mulf %79, %83 : vector<2x128xf32>
    %85 = vector.broadcast %74 : vector<1x128xf32> to vector<2x128xf32>
    %86 = arith.mulf %84, %85 : vector<2x128xf32>
    %87 = vector.broadcast %75 : vector<1x128xf32> to vector<2x128xf32>
    %88 = arith.addf %86, %87 : vector<2x128xf32>
    %cst_63 = arith.constant 0.000000e+00 : f32
    %89 = vector.broadcast %cst_63 : f32 to vector<2x128xf32>
    %90 = arith.maximumf %88, %89 : vector<2x128xf32>
    %c0_64 = arith.constant 0 : index
    %c0_65 = arith.constant 0 : index
    %91 = vector.load %arg29[%c0_64, %c0_65] : memref<2x128xf32, #tpu.memory_space<vmem>>, vector<2x128xf32>
    tpu.vector_store %arg29[%c0_64, %c0_65], %90 {strides = array<i32>} : memref<2x128xf32, #tpu.memory_space<vmem>>, vector<2x128xf32>,
    %c0_66 = arith.constant 0 : index
    %c0_67 = arith.constant 0 : index
    %92 = vector.load %arg24[%c0_66, %c0_67] : memref<128x128xbf16, #tpu.memory_space<vmem>>, vector<128x128xbf16>
    %c0_68 = arith.constant 0 : index
    %c0_69 = arith.constant 0 : index
    %93 = vector.load %arg25[%c0_68, %c0_69] : memref<1x128xf32, #tpu.memory_space<vmem>>, vector<1x128xf32>
    %94 = arith.truncf %90 : vector<2x128xf32> to vector<2x128xbf16>
    %cst_70 = arith.constant dense<0.000000e+00> : vector<2x128xf32>
    %95 = tpu.matmul %94, %92, %cst_70 {dimension_numbers = #tpu.dot_dimension_numbers<[1], [0], [0], [1], [0, 0, 1, 1], [], []>} : vector<2x128xbf16>, vector<128x128xbf16>, vector<2x128xf32> -> vector<2x128xf32>
    %96 = vector.broadcast %93 : vector<1x128xf32> to vector<2x128xf32>
    %97 = arith.addf %95, %96 : vector<2x128xf32>
    %c0_71 = arith.constant 0 : index
    %c0_72 = arith.constant 0 : index
    %98 = vector.load %arg30[%c0_71, %c0_72] : memref<2x128xf32, #tpu.memory_space<vmem>>, vector<2x128xf32>
    tpu.vector_store %arg30[%c0_71, %c0_72], %97 {strides = array<i32>} : memref<2x128xf32, #tpu.memory_space<vmem>>, vector<2x128xf32>,
    return
  }
}

</mosaic_0001>

<llo_original>
// kernel: tpu_custom_call.1
$region0: #{tpu_custom_call.1}
  #allocation0 [shape = 'u32[]', space=smem, size = 0x4, offset = 0x4, fixed_abs, tag = 'smem constant byte address 0x4 - core index']
  #allocation1 [shape = 'u32[144,128]{1,0:T(1,128)}', space=vmem, size = 0x12000, scoped, tag = 'internal scratch']
  %s0 = inlined_call_operand.smem [shape: u32[31], index: -1, kind: input, shape index: {}]
  %s1 = sld [smem:[%s0]]
  %s2 = scalar_lea.smem %s0, 1
  %s3 = sld [smem:[%s2]]
  %s4 = scalar_lea.smem %s0, 2
  %s5 = sld [smem:[%s4]]
  %s6 = scalar_lea.smem %s0, 3
  %s7 = sld [smem:[%s6]]
  %s8 = scalar_lea.smem %s0, 4
  %s9 = sld [smem:[%s8]]
  %s10 = scalar_lea.smem %s0, 5
  %s11 = sld [smem:[%s10]]
  %s12 = scalar_lea.smem %s0, 6
  %s13 = sld [smem:[%s12]]
  %s14 = scalar_lea.smem %s0, 7
  %s15 = sld [smem:[%s14]]
  %s16 = scalar_lea.smem %s0, 8
  %s17 = sld [smem:[%s16]]
  %s18 = scalar_lea.smem %s0, 9
  %s19 = sld [smem:[%s18]]
  %s20 = scalar_lea.smem %s0, 10
  %s21 = sld [smem:[%s20]]
  %s22 = scalar_lea.smem %s0, 11
  %s23 = sld [smem:[%s22]]
  %s24 = scalar_lea.smem %s0, 12
  %s25 = sld [smem:[%s24]]
  %s26 = scalar_lea.smem %s0, 13
  %s27 = sld [smem:[%s26]]
  %s28 = scalar_lea.smem %s0, 14
  %s29 = sld [smem:[%s28]]
  %s30 = scalar_lea.smem %s0, 15
  %s31 = sld [smem:[%s30]]
  %s32 = scalar_lea.smem %s0, 16
  %s33 = sld [smem:[%s32]]
  %s34 = scalar_lea.smem %s0, 17
  %s35 = sld [smem:[%s34]]
  %s36 = scalar_lea.smem %s0, 18
  %s37 = sld [smem:[%s36]]
  %s38 = scalar_lea.smem %s0, 19
  %s39 = sld [smem:[%s38]]
  %s40 = scalar_lea.smem %s0, 20
  %s41 = sld [smem:[%s40]]
  %s42 = scalar_lea.smem %s0, 21
  %s43 = sld [smem:[%s42]]
  %s44 = scalar_lea.smem %s0, 22
  %s45 = sld [smem:[%s44]]
  %s46 = scalar_lea.smem %s0, 23
  %s47 = sld [smem:[%s46]]
  %s48 = scalar_lea.smem %s0, 24
  %s49 = sld [smem:[%s48]]
  %s50 = scalar_lea.smem %s0, 25
  %s51 = sld [smem:[%s50]]
  %s52 = scalar_lea.smem %s0, 26
  %s53 = sld [smem:[%s52]]
  %s54 = scalar_lea.smem %s0, 27
  %s55 = sld [smem:[%s54]]
  %s56 = scalar_lea.smem %s0, 28
  %s57 = sld [smem:[%s56]]
  %s58 = scalar_lea.smem %s0, 29
  %s59 = sld [smem:[%s58]]
  %s60 = scalar_lea.smem %s0, 30
  %s61 = sld [smem:[%s60]]
  %62 = xla_tuple %s53, %s55, %s57, %s59, %s61
  %s63 = sld [smem:[#allocation0]]
  $region174: #{tpu_custom_call.1} parent=0
    _
  %s65 = ssub.s32 1, %s63
  %s66 = scalar_select 0, %s65, %s63
  $region1: #{tpu_custom_call.1} parent=0
    #allocation2 [shape = 'u8[4096]{0}', space=vmem, size = 0x1000, scoped, tag = 'input window, operand 0, single buffered']
    #allocation3 [shape = 's32[1]{0}', space=sflag, size = 0x4, scoped, tag = 'scoped memory for tpu_custom_call.1']
    #allocation4 [shape = 's32[1]{0}', space=sflag, size = 0x4, scoped, tag = 'scoped memory for tpu_custom_call.1']
    #allocation5 [shape = 'u8[4096]{0}', space=vmem, size = 0x1000, scoped, tag = 'input window, operand 1, single buffered']
    #allocation6 [shape = 's32[1]{0}', space=sflag, size = 0x4, scoped, tag = 'scoped memory for tpu_custom_call.1']
    #allocation7 [shape = 'u8[65536]{0}', space=vmem, size = 0x10000, scoped, tag = 'input window, operand 3, single buffered']
    #allocation8 [shape = 'u8[65536]{0}', space=vmem, size = 0x10000, scoped, tag = 'input window, operand 4, single buffered']
    #allocation9 [shape = 's32[1]{0}', space=sflag, size = 0x4, scoped, tag = 'scoped memory for tpu_custom_call.1']
    #allocation10 [shape = 'u8[65536]{0}', space=vmem, size = 0x10000, scoped, tag = 'input window, operand 11, single buffered']
    #allocation11 [shape = 'u8[32768]{0}', space=vmem, size = 0x8000, scoped, tag = 'input window, operand 18, single buffered']
    #allocation12 [shape = 's32[1]{0}', space=sflag, size = 0x4, scoped, tag = 'scoped memory for tpu_custom_call.1']
    #allocation13 [shape = 'u8[32768]{0}', space=vmem, size = 0x8000, scoped, tag = 'input window, operand 24, single buffered']
    #allocation14 [shape = 'u8[8192]{0}', space=vmem, size = 0x2000, scoped, tag = 'output window, operand 0, single buffered']
    #allocation15 [shape = 'u8[1024]{0}', space=vmem, size = 0x400, scoped, tag = 'output window, operand 1, single buffered']
    #allocation16 [shape = 's32[1]{0}', space=sflag, size = 0x4, scoped, tag = 'scoped memory for tpu_custom_call.1']
    #allocation17 [shape = 'u8[1024]{0}', space=vmem, size = 0x400, scoped, tag = 'output window, operand 2, single buffered']
    #allocation18 [shape = 'u8[1024]{0}', space=vmem, size = 0x400, scoped, tag = 'output window, operand 3, single buffered']
    #allocation19 [shape = 's32[1]{0}', space=sflag, size = 0x4, scoped, tag = 'scoped memory for tpu_custom_call.1']
    #allocation20 [shape = 'u8[1024]{0}', space=vmem, size = 0x400, scoped, tag = 'output window, operand 4, single buffered']
    %67 = vsyncpa [#allocation3], 0
    %68 = vsyncpa [#allocation6], 0
    %69 = vsyncpa [#allocation9], 0
    %70 = vsyncpa [#allocation12], 0
    %71 = vsyncpa [#allocation4], 0
    %72 = vsyncpa [#allocation16], 0
    %73 = vsyncpa [#allocation19], 0
    // Predicated region
    $region2: #{tpu_custom_call.1} parent=1 // pred_check
      _
    $region3: #{tpu_custom_call.1} parent=1 // pred_check_branch
      %75 = sbr.rel (0) target = $region5
    $region4: #{tpu_custom_call.1} parent=1 // pred_region
      %s77 = ssub.s32 128, 128
      %78 = vsyncadd [#allocation3], %s77
      %s79 = sshll.u32 [#allocation2], 4
      %s80 = int_to_ptr.vmem [resolvable:$true] %s79
      %85 = dma.hbm_to_vmem [thread:$0]  %s1, 128, %s80, [#allocation3], 64, 64, 4
    $region5: #{tpu_custom_call.1} parent=1 // pred_fallthru
      _
    // Predicated region
    $region6: #{tpu_custom_call.1} parent=1 // pred_check
      _
    $region7: #{tpu_custom_call.1} parent=1 // pred_check_branch
      %87 = sbr.rel (0) target = $region9
    $region8: #{tpu_custom_call.1} parent=1 // pred_region
      %s89 = ssub.s32 128, 128
      %90 = vsyncadd [#allocation6], %s89
      %s91 = sshll.u32 [#allocation5], 4
      %s92 = int_to_ptr.vmem [resolvable:$true] %s91
      %97 = dma.hbm_to_vmem [thread:$0]  %s3, 128, %s92, [#allocation6], 64, 64, 4
    $region9: #{tpu_custom_call.1} parent=1 // pred_fallthru
      _
    // Predicated region
    $region10: #{tpu_custom_call.1} parent=1 // pred_check
      _
    $region11: #{tpu_custom_call.1} parent=1 // pred_check_branch
      %99 = sbr.rel (0) target = $region13
    $region12: #{tpu_custom_call.1} parent=1 // pred_region
      _
    $region13: #{tpu_custom_call.1} parent=1 // pred_fallthru
      _
    // Predicated region
    $region14: #{tpu_custom_call.1} parent=1 // pred_check
      _
    $region15: #{tpu_custom_call.1} parent=1 // pred_check_branch
      %101 = sbr.rel (0) target = $region17
    $region16: #{tpu_custom_call.1} parent=1 // pred_region
      %s103 = ssub.s32 2048, 2048
      %104 = vsyncadd [#allocation6], %s103
      %s105 = sshll.u32 [#allocation7], 4
      %s106 = int_to_ptr.vmem [resolvable:$true] %s105
      %111 = dma.hbm_to_vmem [thread:$0]  %s7, 2048, %s106, [#allocation6], 128, 128, 8
    $region17: #{tpu_custom_call.1} parent=1 // pred_fallthru
      _
    // Predicated region
    $region18: #{tpu_custom_call.1} parent=1 // pred_check
      _
    $region19: #{tpu_custom_call.1} parent=1 // pred_check_branch
      %113 = sbr.rel (0) target = $region21
    $region20: #{tpu_custom_call.1} parent=1 // pred_region
      %s115 = ssub.s32 2048, 2048
      %116 = vsyncadd [#allocation9], %s115
      %s117 = sshll.u32 [#allocation8], 4
      %s118 = int_to_ptr.vmem [resolvable:$true] %s117
      %123 = dma.hbm_to_vmem [thread:$0]  %s9, 2048, %s118, [#allocation9], 128, 128, 8
    $region21: #{tpu_custom_call.1} parent=1 // pred_fallthru
      _
    // Predicated region
    $region22: #{tpu_custom_call.1} parent=1 // pred_check
      _
    $region23: #{tpu_custom_call.1} parent=1 // pred_check_branch
      %125 = sbr.rel (0) target = $region25
    $region24: #{tpu_custom_call.1} parent=1 // pred_region
      _
    $region25: #{tpu_custom_call.1} parent=1 // pred_fallthru
      _
    // Predicated region
    $region26: #{tpu_custom_call.1} parent=1 // pred_check
      _
    $region27: #{tpu_custom_call.1} parent=1 // pred_check_branch
      %127 = sbr.rel (0) target = $region29
    $region28: #{tpu_custom_call.1} parent=1 // pred_region
      _
    $region29: #{tpu_custom_call.1} parent=1 // pred_fallthru
      _
    // Predicated region
    $region30: #{tpu_custom_call.1} parent=1 // pred_check
      _
    $region31: #{tpu_custom_call.1} parent=1 // pred_check_branch
      %129 = sbr.rel (0) target = $region33
    $region32: #{tpu_custom_call.1} parent=1 // pred_region
      _
    $region33: #{tpu_custom_call.1} parent=1 // pred_fallthru
      _
    // Predicated region
    $region34: #{tpu_custom_call.1} parent=1 // pred_check
      _
    $region35: #{tpu_custom_call.1} parent=1 // pred_check_branch
      %131 = sbr.rel (0) target = $region37
    $region36: #{tpu_custom_call.1} parent=1 // pred_region
      _
    $region37: #{tpu_custom_call.1} parent=1 // pred_fallthru
      _
    // Predicated region
    $region38: #{tpu_custom_call.1} parent=1 // pred_check
      _
    $region39: #{tpu_custom_call.1} parent=1 // pred_check_branch
      %133 = sbr.rel (0) target = $region41
    $region40: #{tpu_custom_call.1} parent=1 // pred_region
      _
    $region41: #{tpu_custom_call.1} parent=1 // pred_fallthru
      _
    // Predicated region
    $region42: #{tpu_custom_call.1} parent=1 // pred_check
      _
    $region43: #{tpu_custom_call.1} parent=1 // pred_check_branch
      %135 = sbr.rel (0) target = $region45
    $region44: #{tpu_custom_call.1} parent=1 // pred_region
      _
    $region45: #{tpu_custom_call.1} parent=1 // pred_fallthru
      _
    // Predicated region
    $region46: #{tpu_custom_call.1} parent=1 // pred_check
      _
    $region47: #{tpu_custom_call.1} parent=1 // pred_check_branch
      %137 = sbr.rel (0) target = $region49
    $region48: #{tpu_custom_call.1} parent=1 // pred_region
      %s139 = ssub.s32 2048, 2048
      %140 = vsyncadd [#allocation9], %s139
      %s141 = sshll.u32 [#allocation10], 4
      %s142 = int_to_ptr.vmem [resolvable:$true] %s141
      %147 = dma.hbm_to_vmem [thread:$0]  %s23, 2048, %s142, [#allocation9], 128, 128, 8
    $region49: #{tpu_custom_call.1} parent=1 // pred_fallthru
      _
    // Predicated region
    $region50: #{tpu_custom_call.1} parent=1 // pred_check
      _
    $region51: #{tpu_custom_call.1} parent=1 // pred_check_branch
      %149 = sbr.rel (0) target = $region53
    $region52: #{tpu_custom_call.1} parent=1 // pred_region
      _
    $region53: #{tpu_custom_call.1} parent=1 // pred_fallthru
      _
    // Predicated region
    $region54: #{tpu_custom_call.1} parent=1 // pred_check
      _
    $region55: #{tpu_custom_call.1} parent=1 // pred_check_branch
      %151 = sbr.rel (0) target = $region57
    $region56: #{tpu_custom_call.1} parent=1 // pred_region
      _
    $region57: #{tpu_custom_call.1} parent=1 // pred_fallthru
      _
    // Predicated region
    $region58: #{tpu_custom_call.1} parent=1 // pred_check
      _
    $region59: #{tpu_custom_call.1} parent=1 // pred_check_branch
      %153 = sbr.rel (0) target = $region61
    $region60: #{tpu_custom_call.1} parent=1 // pred_region
      _
    $region61: #{tpu_custom_call.1} parent=1 // pred_fallthru
      _
    // Predicated region
    $region62: #{tpu_custom_call.1} parent=1 // pred_check
      _
    $region63: #{tpu_custom_call.1} parent=1 // pred_check_branch
      %155 = sbr.rel (0) target = $region65
    $region64: #{tpu_custom_call.1} parent=1 // pred_region
      _
    $region65: #{tpu_custom_call.1} parent=1 // pred_fallthru
      _
    // Predicated region
    $region66: #{tpu_custom_call.1} parent=1 // pred_check
      _
    $region67: #{tpu_custom_call.1} parent=1 // pred_check_branch
      %157 = sbr.rel (0) target = $region69
    $region68: #{tpu_custom_call.1} parent=1 // pred_region
      _
    $region69: #{tpu_custom_call.1} parent=1 // pred_fallthru
      _
    // Predicated region
    $region70: #{tpu_custom_call.1} parent=1 // pred_check
      _
    $region71: #{tpu_custom_call.1} parent=1 // pred_check_branch
      %159 = sbr.rel (0) target = $region73
    $region72: #{tpu_custom_call.1} parent=1 // pred_region
      _
    $region73: #{tpu_custom_call.1} parent=1 // pred_fallthru
      _
    // Predicated region
    $region74: #{tpu_custom_call.1} parent=1 // pred_check
      _
    $region75: #{tpu_custom_call.1} parent=1 // pred_check_branch
      %161 = sbr.rel (0) target = $region77
    $region76: #{tpu_custom_call.1} parent=1 // pred_region
      %s163 = ssub.s32 1024, 1024
      %164 = vsyncadd [#allocation12], %s163
      %s165 = sshll.u32 [#allocation11], 4
      %s166 = int_to_ptr.vmem [resolvable:$true] %s165
      %171 = dma.hbm_to_vmem [thread:$0]  %s37, 1024, %s166, [#allocation12], 64, 64, 4
    $region77: #{tpu_custom_call.1} parent=1 // pred_fallthru
      _
    // Predicated region
    $region78: #{tpu_custom_call.1} parent=1 // pred_check
      _
    $region79: #{tpu_custom_call.1} parent=1 // pred_check_branch
      %173 = sbr.rel (0) target = $region81
    $region80: #{tpu_custom_call.1} parent=1 // pred_region
      _
    $region81: #{tpu_custom_call.1} parent=1 // pred_fallthru
      _
    // Predicated region
    $region82: #{tpu_custom_call.1} parent=1 // pred_check
      _
    $region83: #{tpu_custom_call.1} parent=1 // pred_check_branch
      %175 = sbr.rel (0) target = $region85
    $region84: #{tpu_custom_call.1} parent=1 // pred_region
      _
    $region85: #{tpu_custom_call.1} parent=1 // pred_fallthru
      _
    // Predicated region
    $region86: #{tpu_custom_call.1} parent=1 // pred_check
      _
    $region87: #{tpu_custom_call.1} parent=1 // pred_check_branch
      %177 = sbr.rel (0) target = $region89
    $region88: #{tpu_custom_call.1} parent=1 // pred_region
      _
    $region89: #{tpu_custom_call.1} parent=1 // pred_fallthru
      _
    // Predicated region
    $region90: #{tpu_custom_call.1} parent=1 // pred_check
      _
    $region91: #{tpu_custom_call.1} parent=1 // pred_check_branch
      %179 = sbr.rel (0) target = $region93
    $region92: #{tpu_custom_call.1} parent=1 // pred_region
      _
    $region93: #{tpu_custom_call.1} parent=1 // pred_fallthru
      _
    // Predicated region
    $region94: #{tpu_custom_call.1} parent=1 // pred_check
      _
    $region95: #{tpu_custom_call.1} parent=1 // pred_check_branch
      %181 = sbr.rel (0) target = $region97
    $region96: #{tpu_custom_call.1} parent=1 // pred_region
      _
    $region97: #{tpu_custom_call.1} parent=1 // pred_fallthru
      _
    // Predicated region
    $region98: #{tpu_custom_call.1} parent=1 // pred_check
      _
    $region99: #{tpu_custom_call.1} parent=1 // pred_check_branch
      %183 = sbr.rel (0) target = $region101
    $region100: #{tpu_custom_call.1} parent=1 // pred_region
      %s185 = ssub.s32 1024, 1024
      %186 = vsyncadd [#allocation12], %s185
      %s187 = sshll.u32 [#allocation13], 4
      %s188 = int_to_ptr.vmem [resolvable:$true] %s187
      %193 = dma.hbm_to_vmem [thread:$0]  %s49, 1024, %s188, [#allocation12], 64, 64, 4
    $region101: #{tpu_custom_call.1} parent=1 // pred_fallthru
      _
    // Predicated region
    $region102: #{tpu_custom_call.1} parent=1 // pred_check
      _
    $region103: #{tpu_custom_call.1} parent=1 // pred_check_branch
      %195 = sbr.rel (0) target = $region105
    $region104: #{tpu_custom_call.1} parent=1 // pred_region
      _
    $region105: #{tpu_custom_call.1} parent=1 // pred_fallthru
      _
    // Predicated region
    $region106: #{tpu_custom_call.1} parent=1 // pred_check
      _
    $region107: #{tpu_custom_call.1} parent=1 // pred_check_branch
      %197 = sbr.rel (0) target = $region109
    $region108: #{tpu_custom_call.1} parent=1 // pred_region
      %198 = dma.done [#allocation3], 128
    $region109: #{tpu_custom_call.1} parent=1 // pred_fallthru
      _
    // Predicated region
    $region110: #{tpu_custom_call.1} parent=1 // pred_check
      _
    $region111: #{tpu_custom_call.1} parent=1 // pred_check_branch
      %200 = sbr.rel (0) target = $region113
    $region112: #{tpu_custom_call.1} parent=1 // pred_region
      %201 = dma.done [#allocation6], 128
    $region113: #{tpu_custom_call.1} parent=1 // pred_fallthru
      _
    // Predicated region
    $region114: #{tpu_custom_call.1} parent=1 // pred_check
      _
    $region115: #{tpu_custom_call.1} parent=1 // pred_check_branch
      %203 = sbr.rel (0) target = $region117
    $region116: #{tpu_custom_call.1} parent=1 // pred_region
      %204 = dma.done [#allocation6], 2048
    $region117: #{tpu_custom_call.1} parent=1 // pred_fallthru
      _
    // Predicated region
    $region118: #{tpu_custom_call.1} parent=1 // pred_check
      _
    $region119: #{tpu_custom_call.1} parent=1 // pred_check_branch
      %206 = sbr.rel (0) target = $region121
    $region120: #{tpu_custom_call.1} parent=1 // pred_region
      %207 = dma.done [#allocation9], 2048
    $region121: #{tpu_custom_call.1} parent=1 // pred_fallthru
      _
    // Predicated region
    $region122: #{tpu_custom_call.1} parent=1 // pred_check
      _
    $region123: #{tpu_custom_call.1} parent=1 // pred_check_branch
      %209 = sbr.rel (0) target = $region125
    $region124: #{tpu_custom_call.1} parent=1 // pred_region
      %210 = dma.done [#allocation9], 2048
    $region125: #{tpu_custom_call.1} parent=1 // pred_fallthru
      _
    // Predicated region
    $region126: #{tpu_custom_call.1} parent=1 // pred_check
      _
    $region127: #{tpu_custom_call.1} parent=1 // pred_check_branch
      %212 = sbr.rel (0) target = $region129
    $region128: #{tpu_custom_call.1} parent=1 // pred_region
      %213 = dma.done [#allocation12], 1024
    $region129: #{tpu_custom_call.1} parent=1 // pred_fallthru
      _
    // Predicated region
    $region130: #{tpu_custom_call.1} parent=1 // pred_check
      _
    $region131: #{tpu_custom_call.1} parent=1 // pred_check_branch
      %215 = sbr.rel (0) target = $region133
    $region132: #{tpu_custom_call.1} parent=1 // pred_region
      %216 = dma.done [#allocation12], 1024
    $region133: #{tpu_custom_call.1} parent=1 // pred_fallthru
      _
    %v218 = vld [vmem:[#allocation2] sm:$0xf]
    %v219 = vld [vmem:[#allocation2 + $0x4] sm:$0xf]
    %v220 = vld [vmem:[#allocation5] sm:$0xf]
    %v221 = vld [vmem:[#allocation5 + $0x4] sm:$0xf]
    %v222 = vld [vmem:[%s5] sm:$0x1]
    %v223 = vld [vmem:[#allocation7] sm:$0xff]
    %v224 = vld [vmem:[#allocation7 + $0x8] sm:$0xff]
    %v225 = vld [vmem:[#allocation7 + $0x10] sm:$0xff]
    %v226 = vld [vmem:[#allocation7 + $0x18] sm:$0xff]
    %v227 = vld [vmem:[#allocation7 + $0x20] sm:$0xff]
    %v228 = vld [vmem:[#allocation7 + $0x28] sm:$0xff]
    %v229 = vld [vmem:[#allocation7 + $0x30] sm:$0xff]
    %v230 = vld [vmem:[#allocation7 + $0x38] sm:$0xff]
    %v231 = vld [vmem:[#allocation7 + $0x40] sm:$0xff]
    %v232 = vld [vmem:[#allocation7 + $0x48] sm:$0xff]
    %v233 = vld [vmem:[#allocation7 + $0x50] sm:$0xff]
    %v234 = vld [vmem:[#allocation7 + $0x58] sm:$0xff]
    %v235 = vld [vmem:[#allocation7 + $0x60] sm:$0xff]
    %v236 = vld [vmem:[#allocation7 + $0x68] sm:$0xff]
    %v237 = vld [vmem:[#allocation7 + $0x70] sm:$0xff]
    %v238 = vld [vmem:[#allocation7 + $0x78] sm:$0xff]
    %v239 = vld [vmem:[#allocation8] sm:$0xff]
    %v240 = vld [vmem:[#allocation8 + $0x8] sm:$0xff]
    %v241 = vld [vmem:[#allocation8 + $0x10] sm:$0xff]
    %v242 = vld [vmem:[#allocation8 + $0x18] sm:$0xff]
    %v243 = vld [vmem:[#allocation8 + $0x20] sm:$0xff]
    %v244 = vld [vmem:[#allocation8 + $0x28] sm:$0xff]
    %v245 = vld [vmem:[#allocation8 + $0x30] sm:$0xff]
    %v246 = vld [vmem:[#allocation8 + $0x38] sm:$0xff]
    %v247 = vld [vmem:[#allocation8 + $0x40] sm:$0xff]
    %v248 = vld [vmem:[#allocation8 + $0x48] sm:$0xff]
    %v249 = vld [vmem:[#allocation8 + $0x50] sm:$0xff]
    %v250 = vld [vmem:[#allocation8 + $0x58] sm:$0xff]
    %v251 = vld [vmem:[#allocation8 + $0x60] sm:$0xff]
    %v252 = vld [vmem:[#allocation8 + $0x68] sm:$0xff]
    %v253 = vld [vmem:[#allocation8 + $0x70] sm:$0xff]
    %v254 = vld [vmem:[#allocation8 + $0x78] sm:$0xff]
    %v255 = vld [vmem:[%s11] sm:$0x1]
    %v256 = vld [vmem:[%s13] sm:$0x1]
    %v259 = vunpack.c.l.b16 %v220
    %v260 = vunpack.c.l.b16 %v221
    %v261 = vpack.c.b16 %v260, %v259
    %v279 = vunpack.c.l.b16 %v239
    %v280 = vunpack.c.h.b16 %v239
    %v281 = vunpack.c.l.b16 %v240
    %v282 = vunpack.c.h.b16 %v240
    %v283 = vunpack.c.l.b16 %v241
    %v284 = vunpack.c.h.b16 %v241
    %v285 = vunpack.c.l.b16 %v242
    %v286 = vunpack.c.h.b16 %v242
    %v287 = vunpack.c.l.b16 %v243
    %v288 = vunpack.c.h.b16 %v243
    %v289 = vunpack.c.l.b16 %v244
    %v290 = vunpack.c.h.b16 %v244
    %v291 = vunpack.c.l.b16 %v245
    %v292 = vunpack.c.h.b16 %v245
    %v293 = vunpack.c.l.b16 %v246
    %v294 = vunpack.c.h.b16 %v246
    %v295 = vunpack.c.l.b16 %v247
    %v296 = vunpack.c.h.b16 %v247
    %v297 = vunpack.c.l.b16 %v248
    %v298 = vunpack.c.h.b16 %v248
    %v299 = vunpack.c.l.b16 %v249
    %v300 = vunpack.c.h.b16 %v249
    %v301 = vunpack.c.l.b16 %v250
    %v302 = vunpack.c.h.b16 %v250
    %v303 = vunpack.c.l.b16 %v251
    %v304 = vunpack.c.h.b16 %v251
    %v305 = vunpack.c.l.b16 %v252
    %v306 = vunpack.c.h.b16 %v252
    %v307 = vunpack.c.l.b16 %v253
    %v308 = vunpack.c.h.b16 %v253
    %v309 = vunpack.c.l.b16 %v254
    %v310 = vunpack.c.h.b16 %v254
    %v311 = vpack.c.b16 %v281, %v279
    %v312 = vpack.c.b16 %v282, %v280
    %v313 = vpack.c.b16 %v285, %v283
    %v314 = vpack.c.b16 %v286, %v284
    %v315 = vpack.c.b16 %v289, %v287
    %v316 = vpack.c.b16 %v290, %v288
    %v317 = vpack.c.b16 %v293, %v291
    %v318 = vpack.c.b16 %v294, %v292
    %v319 = vpack.c.b16 %v297, %v295
    %v320 = vpack.c.b16 %v298, %v296
    %v321 = vpack.c.b16 %v301, %v299
    %v322 = vpack.c.b16 %v302, %v300
    %v323 = vpack.c.b16 %v305, %v303
    %v324 = vpack.c.b16 %v306, %v304
    %v325 = vpack.c.b16 %v309, %v307
    %v326 = vpack.c.b16 %v310, %v308
    %343 = vmatprep.subr.bf16.mxu0 %v326
    %344 = vmatpush1.bf16.msra.mxu0 %v325
    %345 = vmatprep.subr.bf16.mxu0 %v324
    %346 = vmatpush1.bf16.msra.mxu0 %v323
    %347 = vmatprep.subr.bf16.mxu0 %v322
    %348 = vmatpush1.bf16.msra.mxu0 %v321
    %349 = vmatprep.subr.bf16.mxu0 %v320
    %350 = vmatpush1.bf16.msra.mxu0 %v319
    %351 = vmatprep.subr.bf16.mxu0 %v318
    %352 = vmatpush1.bf16.msra.mxu0 %v317
    %353 = vmatprep.subr.bf16.mxu0 %v316
    %354 = vmatpush1.bf16.msra.mxu0 %v315
    %355 = vmatprep.subr.bf16.mxu0 %v314
    %356 = vmatpush1.bf16.msra.mxu0 %v313
    %357 = vmatprep.subr.bf16.mxu0 %v312
    %358 = vmatpush1.bf16.msra.mxu0 %v311
    %359 = vmatprep.subr.bf16.mxu0 0
    %360 = vmatpush2.bf16.msra.mxu0 0
    %361 = vmatprep.subr.bf16.mxu0 0
    %362 = vmatpush2.bf16.msra.mxu0 0
    %363 = vmatprep.subr.bf16.mxu0 0
    %364 = vmatpush2.bf16.msra.mxu0 0
    %365 = vmatprep.subr.bf16.mxu0 0
    %366 = vmatpush2.bf16.msra.mxu0 0
    %367 = vmatprep.subr.bf16.mxu0 0
    %368 = vmatpush2.bf16.msra.mxu0 0
    %369 = vmatprep.subr.bf16.mxu0 0
    %370 = vmatpush2.bf16.msra.mxu0 0
    %371 = vmatprep.subr.bf16.mxu0 0
    %372 = vmatpush2.bf16.msra.mxu0 0
    %373 = vmatprep.subr.bf16.mxu0 0
    %374 = vmatpush2.bf16.msra.mxu0 0
    %375 = vmatprep.mubr.bf16.mxu0 0
    %376 = vmatmul.mubr.bf16.gmra.mxu0 %v261
    %v377 = vpop.f32.mrf.mxu0
    %v378 = vadd.f32 0.0, %v377
    %v379 = vpop.f32.mrf.mxu0
    %v380 = vadd.f32 0.0, %v379
    %v381 = vpop.f32.mrf.mxu0
    %v382 = vadd.f32 0.0, %v381
    %v383 = vpop.f32.mrf.mxu0
    %v384 = vadd.f32 0.0, %v383
    %385 = vdwg.mxu0
    %v388 = vunpack.c.l.b16 %v218
    %v389 = vunpack.c.l.b16 %v219
    %v390 = vpack.c.b16 %v389, %v388
    %v408 = vunpack.c.l.b16 %v223
    %v409 = vunpack.c.h.b16 %v223
    %v410 = vunpack.c.l.b16 %v224
    %v411 = vunpack.c.h.b16 %v224
    %v412 = vunpack.c.l.b16 %v225
    %v413 = vunpack.c.h.b16 %v225
    %v414 = vunpack.c.l.b16 %v226
    %v415 = vunpack.c.h.b16 %v226
    %v416 = vunpack.c.l.b16 %v227
    %v417 = vunpack.c.h.b16 %v227
    %v418 = vunpack.c.l.b16 %v228
    %v419 = vunpack.c.h.b16 %v228
    %v420 = vunpack.c.l.b16 %v229
    %v421 = vunpack.c.h.b16 %v229
    %v422 = vunpack.c.l.b16 %v230
    %v423 = vunpack.c.h.b16 %v230
    %v424 = vunpack.c.l.b16 %v231
    %v425 = vunpack.c.h.b16 %v231
    %v426 = vunpack.c.l.b16 %v232
    %v427 = vunpack.c.h.b16 %v232
    %v428 = vunpack.c.l.b16 %v233
    %v429 = vunpack.c.h.b16 %v233
    %v430 = vunpack.c.l.b16 %v234
    %v431 = vunpack.c.h.b16 %v234
    %v432 = vunpack.c.l.b16 %v235
    %v433 = vunpack.c.h.b16 %v235
    %v434 = vunpack.c.l.b16 %v236
    %v435 = vunpack.c.h.b16 %v236
    %v436 = vunpack.c.l.b16 %v237
    %v437 = vunpack.c.h.b16 %v237
    %v438 = vunpack.c.l.b16 %v238
    %v439 = vunpack.c.h.b16 %v238
    %v440 = vpack.c.b16 %v410, %v408
    %v441 = vpack.c.b16 %v411, %v409
    %v442 = vpack.c.b16 %v414, %v412
    %v443 = vpack.c.b16 %v415, %v413
    %v444 = vpack.c.b16 %v418, %v416
    %v445 = vpack.c.b16 %v419, %v417
    %v446 = vpack.c.b16 %v422, %v420
    %v447 = vpack.c.b16 %v423, %v421
    %v448 = vpack.c.b16 %v426, %v424
    %v449 = vpack.c.b16 %v427, %v425
    %v450 = vpack.c.b16 %v430, %v428
    %v451 = vpack.c.b16 %v431, %v429
    %v452 = vpack.c.b16 %v434, %v432
    %v453 = vpack.c.b16 %v435, %v433
    %v454 = vpack.c.b16 %v438, %v436
    %v455 = vpack.c.b16 %v439, %v437
    %472 = vmatprep.subr.bf16.mxu0 %v455
    %473 = vmatpush1.bf16.msra.mxu0 %v454
    %474 = vmatprep.subr.bf16.mxu0 %v453
    %475 = vmatpush1.bf16.msra.mxu0 %v452
    %476 = vmatprep.subr.bf16.mxu0 %v451
    %477 = vmatpush1.bf16.msra.mxu0 %v450
    %478 = vmatprep.subr.bf16.mxu0 %v449
    %479 = vmatpush1.bf16.msra.mxu0 %v448
    %480 = vmatprep.subr.bf16.mxu0 %v447
    %481 = vmatpush1.bf16.msra.mxu0 %v446
    %482 = vmatprep.subr.bf16.mxu0 %v445
    %483 = vmatpush1.bf16.msra.mxu0 %v444
    %484 = vmatprep.subr.bf16.mxu0 %v443
    %485 = vmatpush1.bf16.msra.mxu0 %v442
    %486 = vmatprep.subr.bf16.mxu0 %v441
    %487 = vmatpush1.bf16.msra.mxu0 %v440
    %488 = vmatprep.subr.bf16.mxu0 0
    %489 = vmatpush2.bf16.msra.mxu0 0
    %490 = vmatprep.subr.bf16.mxu0 0
    %491 = vmatpush2.bf16.msra.mxu0 0
    %492 = vmatprep.subr.bf16.mxu0 0
    %493 = vmatpush2.bf16.msra.mxu0 0
    %494 = vmatprep.subr.bf16.mxu0 0
    %495 = vmatpush2.bf16.msra.mxu0 0
    %496 = vmatprep.subr.bf16.mxu0 0
    %497 = vmatpush2.bf16.msra.mxu0 0
    %498 = vmatprep.subr.bf16.mxu0 0
    %499 = vmatpush2.bf16.msra.mxu0 0
    %500 = vmatprep.subr.bf16.mxu0 0
    %501 = vmatpush2.bf16.msra.mxu0 0
    %502 = vmatprep.subr.bf16.mxu0 0
    %503 = vmatpush2.bf16.msra.mxu0 0
    %504 = vmatprep.mubr.bf16.mxu0 0
    %505 = vmatmul.mubr.bf16.gmra.mxu0 %v390
    %v506 = vpop.f32.mrf.mxu0
    %v507 = vadd.f32 %v378, %v506
    %v508 = vpop.f32.mrf.mxu0
    %v509 = vadd.f32 %v380, %v508
    %v510 = vpop.f32.mrf.mxu0
    %v511 = vadd.f32 %v382, %v510
    %v512 = vpop.f32.mrf.mxu0
    %v513 = vadd.f32 %v384, %v512
    %514 = vdwg.mxu0
    %v516 = vlaneseq
    %v517 = vshrl.u32 %v516, 7
    %v518 = vsub.s32 0, %v517
    %v519 = vrot.slane %v255, %v518
    %v521 = vadd.f32 %v507, %v519
    %v522 = vadd.f32 %v511, %v519
    %v523 = vmax.f32 %v521, 0.0
    %v524 = vmax.f32 %v522, 0.0
    %v525 = vpack.c.bf16 %v513, %v509
    %v527 = vlaneseq
    %v528 = vshrl.u32 %v527, 7
    %v529 = vsub.s32 0, %v528
    %v530 = vrot.slane %v256, %v529
    %vm532 = vcmask 130048
    %v534 = vsel %vm532, %v222, 0
    %536 = vmatprep.subr.bf16.mxu0 0
    %537 = vmatpush1.bf16.msra.mxu0 0
    %538 = vmatprep.subr.bf16.mxu0 0
    %539 = vmatpush1.bf16.msra.mxu0 0
    %540 = vmatprep.subr.bf16.mxu0 0
    %541 = vmatpush1.bf16.msra.mxu0 0
    %542 = vmatprep.subr.bf16.mxu0 0
    %543 = vmatpush1.bf16.msra.mxu0 0
    %544 = vmatprep.subr.bf16.mxu0 0
    %545 = vmatpush1.bf16.msra.mxu0 0
    %546 = vmatprep.subr.bf16.mxu0 0
    %547 = vmatpush1.bf16.msra.mxu0 0
    %548 = vmatprep.subr.bf16.mxu0 0
    %549 = vmatpush1.bf16.msra.mxu0 0
    %550 = vmatprep.subr.bf16.mxu0 0
    %551 = vmatpush1.bf16.msra.mxu0 %v525
    %552 = vmatprep.subr.bf16.mxu0 0
    %553 = vmatpush2.bf16.msra.mxu0 0
    %554 = vmatprep.subr.bf16.mxu0 0
    %555 = vmatpush2.bf16.msra.mxu0 0
    %556 = vmatprep.subr.bf16.mxu0 0
    %557 = vmatpush2.bf16.msra.mxu0 0
    %558 = vmatprep.subr.bf16.mxu0 0
    %559 = vmatpush2.bf16.msra.mxu0 0
    %560 = vmatprep.subr.bf16.mxu0 0
    %561 = vmatpush2.bf16.msra.mxu0 0
    %562 = vmatprep.subr.bf16.mxu0 0
    %563 = vmatpush2.bf16.msra.mxu0 0
    %564 = vmatprep.subr.bf16.mxu0 0
    %565 = vmatpush2.bf16.msra.mxu0 0
    %566 = vmatprep.subr.bf16.mxu0 0
    %567 = vmatpush2.bf16.msra.mxu0 0
    %568 = vmatprep.mubr.bf16.mxu0 0
    %569 = vmatmul.mubr.bf16.gmra.mxu0 %v534
    %v570 = vpop.f32.mrf.mxu0
    %v571 = vadd.f32 %v530, %v570
    %v572 = vpop.f32.mrf.mxu0
    %v573 = vpop.f32.mrf.mxu0
    %v574 = vpop.f32.mrf.mxu0
    %575 = vdwg.mxu0
    %v576 = vld [vmem:[%s15] sm:$0x1]
    %v577 = vld [vmem:[%s17] sm:$0x1]
    %v578 = vld [vmem:[%s19] sm:$0x1]
    %v579 = vld [vmem:[%s21] sm:$0x1]
    %v581 = vlaneseq
    %v582 = vshrl.u32 %v581, 7
    %v583 = vsub.s32 0, %v582
    %v584 = vrot.slane %v578, %v583
    %v586 = vsub.f32 %v571, %v584
    %v587 = vadd.f32 %v579, 1e-05
    %v588 = vrsqrt.pop %v587
    %v590 = vlaneseq
    %v591 = vshrl.u32 %v590, 7
    %v592 = vsub.s32 0, %v591
    %v593 = vrot.slane %v588, %v592
    %v595 = vmul.f32 %v586, %v593
    %v597 = vlaneseq
    %v598 = vshrl.u32 %v597, 7
    %v599 = vsub.s32 0, %v598
    %v600 = vrot.slane %v576, %v599
    %v602 = vmul.f32 %v595, %v600
    %v604 = vlaneseq
    %v605 = vshrl.u32 %v604, 7
    %v606 = vsub.s32 0, %v605
    %v607 = vrot.slane %v577, %v606
    %v609 = vadd.f32 %v602, %v607
    %610 = vst [vmem:[#allocation15] sm:$0x3] %v609
    %v611 = vpack.c.bf16 %v524, %v523
    %v612 = vld [vmem:[#allocation10] sm:$0xff]
    %v613 = vld [vmem:[#allocation10 + $0x8] sm:$0xff]
    %v614 = vld [vmem:[#allocation10 + $0x10] sm:$0xff]
    %v615 = vld [vmem:[#allocation10 + $0x18] sm:$0xff]
    %v616 = vld [vmem:[#allocation10 + $0x20] sm:$0xff]
    %v617 = vld [vmem:[#allocation10 + $0x28] sm:$0xff]
    %v618 = vld [vmem:[#allocation10 + $0x30] sm:$0xff]
    %v619 = vld [vmem:[#allocation10 + $0x38] sm:$0xff]
    %v620 = vld [vmem:[#allocation10 + $0x40] sm:$0xff]
    %v621 = vld [vmem:[#allocation10 + $0x48] sm:$0xff]
    %v622 = vld [vmem:[#allocation10 + $0x50] sm:$0xff]
    %v623 = vld [vmem:[#allocation10 + $0x58] sm:$0xff]
    %v624 = vld [vmem:[#allocation10 + $0x60] sm:$0xff]
    %v625 = vld [vmem:[#allocation10 + $0x68] sm:$0xff]
    %v626 = vld [vmem:[#allocation10 + $0x70] sm:$0xff]
    %v627 = vld [vmem:[#allocation10 + $0x78] sm:$0xff]
    %v628 = vld [vmem:[%s25] sm:$0x1]
    %v629 = vld [vmem:[%s27] sm:$0x1]
    %v646 = vunpack.c.l.b16 %v612
    %v647 = vunpack.c.h.b16 %v612
    %v648 = vunpack.c.l.b16 %v613
    %v649 = vunpack.c.h.b16 %v613
    %v650 = vunpack.c.l.b16 %v614
    %v651 = vunpack.c.h.b16 %v614
    %v652 = vunpack.c.l.b16 %v615
    %v653 = vunpack.c.h.b16 %v615
    %v654 = vunpack.c.l.b16 %v616
    %v655 = vunpack.c.h.b16 %v616
    %v656 = vunpack.c.l.b16 %v617
    %v657 = vunpack.c.h.b16 %v617
    %v658 = vunpack.c.l.b16 %v618
    %v659 = vunpack.c.h.b16 %v618
    %v660 = vunpack.c.l.b16 %v619
    %v661 = vunpack.c.h.b16 %v619
    %v662 = vunpack.c.l.b16 %v620
    %v663 = vunpack.c.h.b16 %v620
    %v664 = vunpack.c.l.b16 %v621
    %v665 = vunpack.c.h.b16 %v621
    %v666 = vunpack.c.l.b16 %v622
    %v667 = vunpack.c.h.b16 %v622
    %v668 = vunpack.c.l.b16 %v623
    %v669 = vunpack.c.h.b16 %v623
    %v670 = vunpack.c.l.b16 %v624
    %v671 = vunpack.c.h.b16 %v624
    %v672 = vunpack.c.l.b16 %v625
    %v673 = vunpack.c.h.b16 %v625
    %v674 = vunpack.c.l.b16 %v626
    %v675 = vunpack.c.h.b16 %v626
    %v676 = vunpack.c.l.b16 %v627
    %v677 = vunpack.c.h.b16 %v627
    %v678 = vpack.c.b16 %v648, %v646
    %v679 = vpack.c.b16 %v649, %v647
    %v680 = vpack.c.b16 %v652, %v650
    %v681 = vpack.c.b16 %v653, %v651
    %v682 = vpack.c.b16 %v656, %v654
    %v683 = vpack.c.b16 %v657, %v655
    %v684 = vpack.c.b16 %v660, %v658
    %v685 = vpack.c.b16 %v661, %v659
    %v686 = vpack.c.b16 %v664, %v662
    %v687 = vpack.c.b16 %v665, %v663
    %v688 = vpack.c.b16 %v668, %v666
    %v689 = vpack.c.b16 %v669, %v667
    %v690 = vpack.c.b16 %v672, %v670
    %v691 = vpack.c.b16 %v673, %v671
    %v692 = vpack.c.b16 %v676, %v674
    %v693 = vpack.c.b16 %v677, %v675
    %710 = vmatprep.subr.bf16.mxu0 %v693
    %711 = vmatpush1.bf16.msra.mxu0 %v692
    %712 = vmatprep.subr.bf16.mxu0 %v691
    %713 = vmatpush1.bf16.msra.mxu0 %v690
    %714 = vmatprep.subr.bf16.mxu0 %v689
    %715 = vmatpush1.bf16.msra.mxu0 %v688
    %716 = vmatprep.subr.bf16.mxu0 %v687
    %717 = vmatpush1.bf16.msra.mxu0 %v686
    %718 = vmatprep.subr.bf16.mxu0 %v685
    %719 = vmatpush1.bf16.msra.mxu0 %v684
    %720 = vmatprep.subr.bf16.mxu0 %v683
    %721 = vmatpush1.bf16.msra.mxu0 %v682
    %722 = vmatprep.subr.bf16.mxu0 %v681
    %723 = vmatpush1.bf16.msra.mxu0 %v680
    %724 = vmatprep.subr.bf16.mxu0 %v679
    %725 = vmatpush1.bf16.msra.mxu0 %v678
    %726 = vmatprep.subr.bf16.mxu0 0
    %727 = vmatpush2.bf16.msra.mxu0 0
    %728 = vmatprep.subr.bf16.mxu0 0
    %729 = vmatpush2.bf16.msra.mxu0 0
    %730 = vmatprep.subr.bf16.mxu0 0
    %731 = vmatpush2.bf16.msra.mxu0 0
    %732 = vmatprep.subr.bf16.mxu0 0
    %733 = vmatpush2.bf16.msra.mxu0 0
    %734 = vmatprep.subr.bf16.mxu0 0
    %735 = vmatpush2.bf16.msra.mxu0 0
    %736 = vmatprep.subr.bf16.mxu0 0
    %737 = vmatpush2.bf16.msra.mxu0 0
    %738 = vmatprep.subr.bf16.mxu0 0
    %739 = vmatpush2.bf16.msra.mxu0 0
    %740 = vmatprep.subr.bf16.mxu0 0
    %741 = vmatpush2.bf16.msra.mxu0 0
    %742 = vmatprep.mubr.bf16.mxu0 0
    %743 = vmatmul.mubr.bf16.gmra.mxu0 %v611
    %v744 = vpop.f32.mrf.mxu0
    %v745 = vadd.f32 0.0, %v744
    %v746 = vpop.f32.mrf.mxu0
    %v747 = vadd.f32 0.0, %v746
    %v748 = vpop.f32.mrf.mxu0
    %v749 = vadd.f32 0.0, %v748
    %v750 = vpop.f32.mrf.mxu0
    %v751 = vadd.f32 0.0, %v750
    %752 = vdwg.mxu0
    %v754 = vlaneseq
    %v755 = vshrl.u32 %v754, 7
    %v756 = vsub.s32 0, %v755
    %v757 = vrot.slane %v628, %v756
    %v759 = vadd.f32 %v745, %v757
    %v760 = vadd.f32 %v749, %v757
    %v761 = vmax.f32 %v759, 0.0
    %v762 = vmax.f32 %v760, 0.0
    %v763 = vpack.c.bf16 %v751, %v747
    %v765 = vlaneseq
    %v766 = vshrl.u32 %v765, 7
    %v767 = vsub.s32 0, %v766
    %v768 = vrot.slane %v629, %v767
    %770 = vmatprep.subr.bf16.mxu0 0
    %771 = vmatpush1.bf16.msra.mxu0 0
    %772 = vmatprep.subr.bf16.mxu0 0
    %773 = vmatpush1.bf16.msra.mxu0 0
    %774 = vmatprep.subr.bf16.mxu0 0
    %775 = vmatpush1.bf16.msra.mxu0 0
    %776 = vmatprep.subr.bf16.mxu0 0
    %777 = vmatpush1.bf16.msra.mxu0 0
    %778 = vmatprep.subr.bf16.mxu0 0
    %779 = vmatpush1.bf16.msra.mxu0 0
    %780 = vmatprep.subr.bf16.mxu0 0
    %781 = vmatpush1.bf16.msra.mxu0 0
    %782 = vmatprep.subr.bf16.mxu0 0
    %783 = vmatpush1.bf16.msra.mxu0 0
    %784 = vmatprep.subr.bf16.mxu0 0
    %785 = vmatpush1.bf16.msra.mxu0 %v763
    %786 = vmatprep.subr.bf16.mxu0 0
    %787 = vmatpush2.bf16.msra.mxu0 0
    %788 = vmatprep.subr.bf16.mxu0 0
    %789 = vmatpush2.bf16.msra.mxu0 0
    %790 = vmatprep.subr.bf16.mxu0 0
    %791 = vmatpush2.bf16.msra.mxu0 0
    %792 = vmatprep.subr.bf16.mxu0 0
    %793 = vmatpush2.bf16.msra.mxu0 0
    %794 = vmatprep.subr.bf16.mxu0 0
    %795 = vmatpush2.bf16.msra.mxu0 0
    %796 = vmatprep.subr.bf16.mxu0 0
    %797 = vmatpush2.bf16.msra.mxu0 0
    %798 = vmatprep.subr.bf16.mxu0 0
    %799 = vmatpush2.bf16.msra.mxu0 0
    %800 = vmatprep.subr.bf16.mxu0 0
    %801 = vmatpush2.bf16.msra.mxu0 0
    %802 = vmatprep.mubr.bf16.mxu0 0
    %803 = vmatmul.mubr.bf16.gmra.mxu0 %v534
    %v804 = vpop.f32.mrf.mxu0
    %v805 = vadd.f32 %v768, %v804
    %v806 = vpop.f32.mrf.mxu0
    %v807 = vpop.f32.mrf.mxu0
    %v808 = vpop.f32.mrf.mxu0
    %809 = vdwg.mxu0
    %v810 = vld [vmem:[%s29] sm:$0x1]
    %v811 = vld [vmem:[%s31] sm:$0x1]
    %v812 = vld [vmem:[%s33] sm:$0x1]
    %v813 = vld [vmem:[%s35] sm:$0x1]
    %v815 = vlaneseq
    %v816 = vshrl.u32 %v815, 7
    %v817 = vsub.s32 0, %v816
    %v818 = vrot.slane %v812, %v817
    %v820 = vsub.f32 %v805, %v818
    %v821 = vadd.f32 %v813, 1e-05
    %v822 = vrsqrt.pop %v821
    %v824 = vlaneseq
    %v825 = vshrl.u32 %v824, 7
    %v826 = vsub.s32 0, %v825
    %v827 = vrot.slane %v822, %v826
    %v829 = vmul.f32 %v820, %v827
    %v831 = vlaneseq
    %v832 = vshrl.u32 %v831, 7
    %v833 = vsub.s32 0, %v832
    %v834 = vrot.slane %v810, %v833
    %v836 = vmul.f32 %v829, %v834
    %v838 = vlaneseq
    %v839 = vshrl.u32 %v838, 7
    %v840 = vsub.s32 0, %v839
    %v841 = vrot.slane %v811, %v840
    %v843 = vadd.f32 %v836, %v841
    %844 = vst [vmem:[#allocation17] sm:$0x3] %v843
    %845 = vst [vmem:[#allocation14] sm:$0xff] %v761
    %846 = vst [vmem:[#allocation14 + $0x8] sm:$0xff] %v762
    %v847 = vld [vmem:[#allocation11] sm:$0xf]
    %v848 = vld [vmem:[#allocation11 + $0x4] sm:$0xf]
    %v849 = vld [vmem:[#allocation11 + $0x8] sm:$0xf]
    %v850 = vld [vmem:[#allocation11 + $0xc] sm:$0xf]
    %v851 = vld [vmem:[#allocation11 + $0x10] sm:$0xf]
    %v852 = vld [vmem:[#allocation11 + $0x14] sm:$0xf]
    %v853 = vld [vmem:[#allocation11 + $0x18] sm:$0xf]
    %v854 = vld [vmem:[#allocation11 + $0x1c] sm:$0xf]
    %v855 = vld [vmem:[#allocation11 + $0x20] sm:$0xf]
    %v856 = vld [vmem:[#allocation11 + $0x24] sm:$0xf]
    %v857 = vld [vmem:[#allocation11 + $0x28] sm:$0xf]
    %v858 = vld [vmem:[#allocation11 + $0x2c] sm:$0xf]
    %v859 = vld [vmem:[#allocation11 + $0x30] sm:$0xf]
    %v860 = vld [vmem:[#allocation11 + $0x34] sm:$0xf]
    %v861 = vld [vmem:[#allocation11 + $0x38] sm:$0xf]
    %v862 = vld [vmem:[#allocation11 + $0x3c] sm:$0xf]
    %v863 = vld [vmem:[%s39] sm:$0x1]
    %v864 = vpack.c.bf16 %v843, %v843
    %v866 = vlaneseq
    %v867 = vshrl.u32 %v866, 7
    %v868 = vsub.s32 0, %v867
    %v869 = vrot.slane %v863, %v868
    %v887 = vunpack.c.l.b16 %v847
    %v888 = vunpack.c.l.b16 %v848
    %v889 = vunpack.c.l.b16 %v849
    %v890 = vunpack.c.l.b16 %v850
    %v891 = vunpack.c.l.b16 %v851
    %v892 = vunpack.c.l.b16 %v852
    %v893 = vunpack.c.l.b16 %v853
    %v894 = vunpack.c.l.b16 %v854
    %v895 = vunpack.c.l.b16 %v855
    %v896 = vunpack.c.l.b16 %v856
    %v897 = vunpack.c.l.b16 %v857
    %v898 = vunpack.c.l.b16 %v858
    %v899 = vunpack.c.l.b16 %v859
    %v900 = vunpack.c.l.b16 %v860
    %v901 = vunpack.c.l.b16 %v861
    %v902 = vunpack.c.l.b16 %v862
    %v903 = vpack.c.b16 %v888, %v887
    %v904 = vpack.c.b16 %v890, %v889
    %v905 = vpack.c.b16 %v892, %v891
    %v906 = vpack.c.b16 %v894, %v893
    %v907 = vpack.c.b16 %v896, %v895
    %v908 = vpack.c.b16 %v898, %v897
    %v909 = vpack.c.b16 %v900, %v899
    %v910 = vpack.c.b16 %v902, %v901
    %919 = vmatprep.subr.bf16.mxu0 0
    %920 = vmatpush1.bf16.msra.mxu0 %v910
    %921 = vmatprep.subr.bf16.mxu0 0
    %922 = vmatpush1.bf16.msra.mxu0 %v909
    %923 = vmatprep.subr.bf16.mxu0 0
    %924 = vmatpush1.bf16.msra.mxu0 %v908
    %925 = vmatprep.subr.bf16.mxu0 0
    %926 = vmatpush1.bf16.msra.mxu0 %v907
    %927 = vmatprep.subr.bf16.mxu0 0
    %928 = vmatpush1.bf16.msra.mxu0 %v906
    %929 = vmatprep.subr.bf16.mxu0 0
    %930 = vmatpush1.bf16.msra.mxu0 %v905
    %931 = vmatprep.subr.bf16.mxu0 0
    %932 = vmatpush1.bf16.msra.mxu0 %v904
    %933 = vmatprep.subr.bf16.mxu0 0
    %934 = vmatpush1.bf16.msra.mxu0 %v903
    %935 = vmatprep.subr.bf16.mxu0 0
    %936 = vmatpush2.bf16.msra.mxu0 0
    %937 = vmatprep.subr.bf16.mxu0 0
    %938 = vmatpush2.bf16.msra.mxu0 0
    %939 = vmatprep.subr.bf16.mxu0 0
    %940 = vmatpush2.bf16.msra.mxu0 0
    %941 = vmatprep.subr.bf16.mxu0 0
    %942 = vmatpush2.bf16.msra.mxu0 0
    %943 = vmatprep.subr.bf16.mxu0 0
    %944 = vmatpush2.bf16.msra.mxu0 0
    %945 = vmatprep.subr.bf16.mxu0 0
    %946 = vmatpush2.bf16.msra.mxu0 0
    %947 = vmatprep.subr.bf16.mxu0 0
    %948 = vmatpush2.bf16.msra.mxu0 0
    %949 = vmatprep.subr.bf16.mxu0 0
    %950 = vmatpush2.bf16.msra.mxu0 0
    %951 = vmatprep.mubr.bf16.mxu0 0
    %952 = vmatmul.mubr.bf16.gmra.mxu0 %v864
    %v953 = vpop.f32.mrf.mxu0
    %v954 = vadd.f32 %v869, %v953
    %v955 = vpop.f32.mrf.mxu0
    %v956 = vpop.f32.mrf.mxu0
    %v957 = vpop.f32.mrf.mxu0
    %958 = vdwg.mxu0
    %v959 = vld [vmem:[%s41] sm:$0x1]
    %v960 = vld [vmem:[%s43] sm:$0x1]
    %v961 = vld [vmem:[%s45] sm:$0x1]
    %v962 = vld [vmem:[%s47] sm:$0x1]
    %v964 = vlaneseq
    %v965 = vshrl.u32 %v964, 7
    %v966 = vsub.s32 0, %v965
    %v967 = vrot.slane %v961, %v966
    %v969 = vsub.f32 %v954, %v967
    %v970 = vadd.f32 %v962, 1e-05
    %v971 = vrsqrt.pop %v970
    %v973 = vlaneseq
    %v974 = vshrl.u32 %v973, 7
    %v975 = vsub.s32 0, %v974
    %v976 = vrot.slane %v971, %v975
    %v978 = vmul.f32 %v969, %v976
    %v980 = vlaneseq
    %v981 = vshrl.u32 %v980, 7
    %v982 = vsub.s32 0, %v981
    %v983 = vrot.slane %v959, %v982
    %v985 = vmul.f32 %v978, %v983
    %v987 = vlaneseq
    %v988 = vshrl.u32 %v987, 7
    %v989 = vsub.s32 0, %v988
    %v990 = vrot.slane %v960, %v989
    %v992 = vadd.f32 %v985, %v990
    %v993 = vmax.f32 %v992, 0.0
    %994 = vst [vmem:[#allocation18] sm:$0x3] %v993
    %v995 = vld [vmem:[#allocation13] sm:$0xf]
    %v996 = vld [vmem:[#allocation13 + $0x4] sm:$0xf]
    %v997 = vld [vmem:[#allocation13 + $0x8] sm:$0xf]
    %v998 = vld [vmem:[#allocation13 + $0xc] sm:$0xf]
    %v999 = vld [vmem:[#allocation13 + $0x10] sm:$0xf]
    %v1000 = vld [vmem:[#allocation13 + $0x14] sm:$0xf]
    %v1001 = vld [vmem:[#allocation13 + $0x18] sm:$0xf]
    %v1002 = vld [vmem:[#allocation13 + $0x1c] sm:$0xf]
    %v1003 = vld [vmem:[#allocation13 + $0x20] sm:$0xf]
    %v1004 = vld [vmem:[#allocation13 + $0x24] sm:$0xf]
    %v1005 = vld [vmem:[#allocation13 + $0x28] sm:$0xf]
    %v1006 = vld [vmem:[#allocation13 + $0x2c] sm:$0xf]
    %v1007 = vld [vmem:[#allocation13 + $0x30] sm:$0xf]
    %v1008 = vld [vmem:[#allocation13 + $0x34] sm:$0xf]
    %v1009 = vld [vmem:[#allocation13 + $0x38] sm:$0xf]
    %v1010 = vld [vmem:[#allocation13 + $0x3c] sm:$0xf]
    %v1011 = vld [vmem:[%s51] sm:$0x1]
    %v1012 = vpack.c.bf16 %v993, %v993
    %v1014 = vlaneseq
    %v1015 = vshrl.u32 %v1014, 7
    %v1016 = vsub.s32 0, %v1015
    %v1017 = vrot.slane %v1011, %v1016
    %v1035 = vunpack.c.l.b16 %v995
    %v1036 = vunpack.c.l.b16 %v996
    %v1037 = vunpack.c.l.b16 %v997
    %v1038 = vunpack.c.l.b16 %v998
    %v1039 = vunpack.c.l.b16 %v999
    %v1040 = vunpack.c.l.b16 %v1000
    %v1041 = vunpack.c.l.b16 %v1001
    %v1042 = vunpack.c.l.b16 %v1002
    %v1043 = vunpack.c.l.b16 %v1003
    %v1044 = vunpack.c.l.b16 %v1004
    %v1045 = vunpack.c.l.b16 %v1005
    %v1046 = vunpack.c.l.b16 %v1006
    %v1047 = vunpack.c.l.b16 %v1007
    %v1048 = vunpack.c.l.b16 %v1008
    %v1049 = vunpack.c.l.b16 %v1009
    %v1050 = vunpack.c.l.b16 %v1010
    %v1051 = vpack.c.b16 %v1036, %v1035
    %v1052 = vpack.c.b16 %v1038, %v1037
    %v1053 = vpack.c.b16 %v1040, %v1039
    %v1054 = vpack.c.b16 %v1042, %v1041
    %v1055 = vpack.c.b16 %v1044, %v1043
    %v1056 = vpack.c.b16 %v1046, %v1045
    %v1057 = vpack.c.b16 %v1048, %v1047
    %v1058 = vpack.c.b16 %v1050, %v1049
    %1067 = vmatprep.subr.bf16.mxu0 0
    %1068 = vmatpush1.bf16.msra.mxu0 %v1058
    %1069 = vmatprep.subr.bf16.mxu0 0
    %1070 = vmatpush1.bf16.msra.mxu0 %v1057
    %1071 = vmatprep.subr.bf16.mxu0 0
    %1072 = vmatpush1.bf16.msra.mxu0 %v1056
    %1073 = vmatprep.subr.bf16.mxu0 0
    %1074 = vmatpush1.bf16.msra.mxu0 %v1055
    %1075 = vmatprep.subr.bf16.mxu0 0
    %1076 = vmatpush1.bf16.msra.mxu0 %v1054
    %1077 = vmatprep.subr.bf16.mxu0 0
    %1078 = vmatpush1.bf16.msra.mxu0 %v1053
    %1079 = vmatprep.subr.bf16.mxu0 0
    %1080 = vmatpush1.bf16.msra.mxu0 %v1052
    %1081 = vmatprep.subr.bf16.mxu0 0
    %1082 = vmatpush1.bf16.msra.mxu0 %v1051
    %1083 = vmatprep.subr.bf16.mxu0 0
    %1084 = vmatpush2.bf16.msra.mxu0 0
    %1085 = vmatprep.subr.bf16.mxu0 0
    %1086 = vmatpush2.bf16.msra.mxu0 0
    %1087 = vmatprep.subr.bf16.mxu0 0
    %1088 = vmatpush2.bf16.msra.mxu0 0
    %1089 = vmatprep.subr.bf16.mxu0 0
    %1090 = vmatpush2.bf16.msra.mxu0 0
    %1091 = vmatprep.subr.bf16.mxu0 0
    %1092 = vmatpush2.bf16.msra.mxu0 0
    %1093 = vmatprep.subr.bf16.mxu0 0
    %1094 = vmatpush2.bf16.msra.mxu0 0
    %1095 = vmatprep.subr.bf16.mxu0 0
    %1096 = vmatpush2.bf16.msra.mxu0 0
    %1097 = vmatprep.subr.bf16.mxu0 0
    %1098 = vmatpush2.bf16.msra.mxu0 0
    %1099 = vmatprep.mubr.bf16.mxu0 0
    %1100 = vmatmul.mubr.bf16.gmra.mxu0 %v1012
    %v1101 = vpop.f32.mrf.mxu0
    %v1102 = vadd.f32 %v1017, %v1101
    %v1103 = vpop.f32.mrf.mxu0
    %v1104 = vpop.f32.mrf.mxu0
    %v1105 = vpop.f32.mrf.mxu0
    %1106 = vdwg.mxu0
    %1107 = vst [vmem:[#allocation20] sm:$0x3] %v1102
    // Predicated region
    $region134: #{tpu_custom_call.1} parent=1 // pred_check
      _
    $region135: #{tpu_custom_call.1} parent=1 // pred_check_branch
      %1109 = sbr.rel (0) target = $region137
    $region136: #{tpu_custom_call.1} parent=1 // pred_region
      %s1111 = ssub.s32 256, 256
      %1112 = vsyncadd [#allocation4], %s1111
      %s1113 = sshll.u32 [#allocation14], 4
      %s1114 = int_to_ptr.vmem [resolvable:$true] %s1113
      %1119 = dma.vmem_to_hbm [thread:$0]  %s1114, 256, %s53, [#allocation4], 128, 128, 8
    $region137: #{tpu_custom_call.1} parent=1 // pred_fallthru
      _
    // Predicated region
    $region138: #{tpu_custom_call.1} parent=1 // pred_check
      _
    $region139: #{tpu_custom_call.1} parent=1 // pred_check_branch
      %1121 = sbr.rel (0) target = $region141
    $region140: #{tpu_custom_call.1} parent=1 // pred_region
      %s1123 = ssub.s32 32, 32
      %1124 = vsyncadd [#allocation16], %s1123
      %s1126 = sshll.u32 [#allocation15], 4
      %s1127 = int_to_ptr.vmem [resolvable:$true] %s1126
      %1129 = dma.vmem_to_hbm [thread:$0]  %s1127, 32, %s55, [#allocation16]
    $region141: #{tpu_custom_call.1} parent=1 // pred_fallthru
      _
    // Predicated region
    $region142: #{tpu_custom_call.1} parent=1 // pred_check
      _
    $region143: #{tpu_custom_call.1} parent=1 // pred_check_branch
      %1131 = sbr.rel (0) target = $region145
    $region144: #{tpu_custom_call.1} parent=1 // pred_region
      %s1133 = ssub.s32 32, 32
      %1134 = vsyncadd [#allocation16], %s1133
      %s1136 = sshll.u32 [#allocation17], 4
      %s1137 = int_to_ptr.vmem [resolvable:$true] %s1136
      %1139 = dma.vmem_to_hbm [thread:$0]  %s1137, 32, %s57, [#allocation16]
    $region145: #{tpu_custom_call.1} parent=1 // pred_fallthru
      _
    // Predicated region
    $region146: #{tpu_custom_call.1} parent=1 // pred_check
      _
    $region147: #{tpu_custom_call.1} parent=1 // pred_check_branch
      %1141 = sbr.rel (0) target = $region149
    $region148: #{tpu_custom_call.1} parent=1 // pred_region
      %s1143 = ssub.s32 32, 32
      %1144 = vsyncadd [#allocation19], %s1143
      %s1146 = sshll.u32 [#allocation18], 4
      %s1147 = int_to_ptr.vmem [resolvable:$true] %s1146
      %1149 = dma.vmem_to_hbm [thread:$0]  %s1147, 32, %s59, [#allocation19]
    $region149: #{tpu_custom_call.1} parent=1 // pred_fallthru
      _
    // Predicated region
    $region150: #{tpu_custom_call.1} parent=1 // pred_check
      _
    $region151: #{tpu_custom_call.1} parent=1 // pred_check_branch
      %1151 = sbr.rel (0) target = $region153
    $region152: #{tpu_custom_call.1} parent=1 // pred_region
      %s1153 = ssub.s32 32, 32
      %1154 = vsyncadd [#allocation19], %s1153
      %s1156 = sshll.u32 [#allocation20], 4
      %s1157 = int_to_ptr.vmem [resolvable:$true] %s1156
      %1159 = dma.vmem_to_hbm [thread:$0]  %s1157, 32, %s61, [#allocation19]
    $region153: #{tpu_custom_call.1} parent=1 // pred_fallthru
      _
    // Predicated region
    $region154: #{tpu_custom_call.1} parent=1 // pred_check
      _
    $region155: #{tpu_custom_call.1} parent=1 // pred_check_branch
      %1161 = sbr.rel (0) target = $region157
    $region156: #{tpu_custom_call.1} parent=1 // pred_region
      %1162 = dma.done [#allocation4], 256
    $region157: #{tpu_custom_call.1} parent=1 // pred_fallthru
      _
    // Predicated region
    $region158: #{tpu_custom_call.1} parent=1 // pred_check
      _
    $region159: #{tpu_custom_call.1} parent=1 // pred_check_branch
      %1164 = sbr.rel (0) target = $region161
    $region160: #{tpu_custom_call.1} parent=1 // pred_region
      %1165 = dma.done [#allocation16], 32
    $region161: #{tpu_custom_call.1} parent=1 // pred_fallthru
      _
    // Predicated region
    $region162: #{tpu_custom_call.1} parent=1 // pred_check
      _
    $region163: #{tpu_custom_call.1} parent=1 // pred_check_branch
      %1167 = sbr.rel (0) target = $region165
    $region164: #{tpu_custom_call.1} parent=1 // pred_region
      %1168 = dma.done [#allocation16], 32
    $region165: #{tpu_custom_call.1} parent=1 // pred_fallthru
      _
    // Predicated region
    $region166: #{tpu_custom_call.1} parent=1 // pred_check
      _
    $region167: #{tpu_custom_call.1} parent=1 // pred_check_branch
      %1170 = sbr.rel (0) target = $region169
    $region168: #{tpu_custom_call.1} parent=1 // pred_region
      %1171 = dma.done [#allocation19], 32
    $region169: #{tpu_custom_call.1} parent=1 // pred_fallthru
      _
    // Predicated region
    $region170: #{tpu_custom_call.1} parent=1 // pred_check
      _
    $region171: #{tpu_custom_call.1} parent=1 // pred_check_branch
      %1173 = sbr.rel (0) target = $region173
    $region172: #{tpu_custom_call.1} parent=1 // pred_region
      %1174 = dma.done [#allocation19], 32
    $region173: #{tpu_custom_call.1} parent=1 // pred_fallthru
      _
    %1175 = vsyncpa [#allocation3], 1
    %1176 = vsyncpa [#allocation6], 1
    %1177 = vsyncpa [#allocation9], 1
    %1178 = vsyncpa [#allocation12], 1
    %1179 = vsyncpa [#allocation4], 1
    %1180 = vsyncpa [#allocation16], 1
    %1181 = vsyncpa [#allocation19], 1

</llo_original>
